<compile_context>
chip_gen: v7x
topology: tpu7x:2x2x1
jax: 0.10.0
libtpu: 0.0.40
codegen_flags: <defaults>
</compile_context>

<pallas_src>
import jax
import jax.numpy as jnp
from jax.experimental import pallas as pl
from jax.experimental.pallas import tpu as pltpu


# ---------------------------------------------------------------------------
# Fused Pallas kernel: all chunks in one launch, grid over the chunk axis
# ---------------------------------------------------------------------------
def encode_chunks_pallas(tokens_flat, multipliers, proj_w, emb_table, *,
                         batch, tokens_per_chunk, n_chunks):
    """tokens_flat: (n_chunks*B*T,) int32 (scalar prefetch, SMEM)
       multipliers: (n_chunks, B, T) f32
       proj_w     : (C, C) bf16
       emb_table  : (V, C) f32 (stays in HBM; rows gathered by DMA)
       returns (B, n_chunks*T, C) f32  -- torch.hstack of per-chunk outputs."""
    B, T = batch, tokens_per_chunk
    C = emb_table.shape[1]

    def kernel(tok_ref, mult_ref, w_ref, emb_hbm, out_ref, emb_vmem, sems):
        c = pl.program_id(0)
        base = c * (B * T)

        # ---- fused embedding gather: one row DMA per token id --------------
        # TODO(synk): at real CLIP scale (B*T=154 rows) switch this static
        # Python unroll to lax.fori_loop / pl.loop to bound code size.
        for i in range(B * T):
            tok = tok_ref[base + i]
            pltpu.make_async_copy(emb_hbm.at[pl.ds(tok, 1), :],
                                  emb_vmem.at[pl.ds(i, 1), :],
                                  sems.at[i]).start()
        for i in range(B * T):
            pltpu.make_async_copy(emb_hbm.at[pl.ds(0, 1), :],
                                  emb_vmem.at[pl.ds(i, 1), :],
                                  sems.at[i]).wait()

        # ---- synthetic encode_with_transformers: one lane-dense MXU matmul -
        # bf16 operands, f32 accumulation.
        z = jnp.dot(emb_vmem[...].astype(jnp.bfloat16), w_ref[...],
                    preferred_element_type=jnp.float32)          # (B*T, C) f32
        z3 = z.reshape(B, T, C)

        # ---- process_tokens: emphasize, then restore the per-chunk mean ----
        # ratio = mean(z) / mean(z*mult) == sum(z) / sum(z*mult) (counts cancel)
        mult = mult_ref[...][:, :, None]                         # (B, T, 1) f32
        row_sum = jnp.sum(z3, axis=-1, keepdims=True)            # (B, T, 1)
        sum_z = jnp.sum(row_sum)
        sum_zm = jnp.sum(row_sum * mult)
        ratio = sum_z / sum_zm            # same div-by-~0 hazard as the original
        out_ref[...] = (z3 * (mult * ratio)).astype(out_ref.dtype)

    grid_spec = pltpu.PrefetchScalarGridSpec(
        num_scalar_prefetch=1,                 # token ids -> SMEM
        grid=(n_chunks,),
        in_specs=[
            # compact multipliers; squeezed chunk dim
            pl.BlockSpec((None, B, T), lambda c, tok: (c, 0, 0)),
            # weight: constant index map -> stays resident in VMEM across grid
            pl.BlockSpec((C, C), lambda c, tok: (0, 0)),
            # embedding table stays in HBM; gathered manually in the kernel
            pl.BlockSpec(memory_space=pl.ANY),
        ],
        out_specs=pl.BlockSpec((B, T, C), lambda c, tok: (0, c, 0)),
        scratch_shapes=[
            pltpu.VMEM((B * T, C), jnp.float32),     # gathered rows
            pltpu.SemaphoreType.DMA((B * T,)),       # one sem per row DMA
        ],
    )

    return pl.pallas_call(
        kernel,
        out_shape=jax.ShapeDtypeStruct((B, n_chunks * T, C), jnp.float32),
        grid_spec=grid_spec,
        compiler_params=pltpu.CompilerParams(
            dimension_semantics=("parallel",),   # chunks independent -> v7x 2 TCs
        ),
    )(tokens_flat, multipliers, proj_w, emb_table)


# ---------------------------------------------------------------------------
# Module wrapper (glue: parameter setup, token padding, chunk layout)
# ---------------------------------------------------------------------------
class FrozenCLIPEmbedderWithCustomWordsPallas:
    # TODO(synk): tokenize / tokenize_line / process_texts / textual-inversion
    # fixes & infotext hashes are host-side Python string + PromptChunk
    # bookkeeping with no Pallas equivalent; this wrapper consumes
    # already-chunked token ids and multipliers.

    def __init__(self, vocab_size=64, hidden=128, chunk_length=6,
                 id_start=0, id_end=1, id_pad=1):
        self.chunk_length = chunk_length          # tokens per chunk (excl. start/end)
        self.tokens_per_chunk = chunk_length + 2
        self.id_start = id_start
        self.id_end = id_end
        self.id_pad = id_pad
        self.hidden = hidden

        # deterministic synthetic parameters (stand-in for the wrapped CLIP)
        k_emb, k_w = jax.random.split(jax.random.PRNGKey(42))
        # table stays f32 (rows gathered per token by DMA); weight stored bf16
        # (native MXU operand, halves its HBM footprint / DMA).
        self.embedding_table = (
            jax.random.normal(k_emb, (vocab_size, hidden), jnp.float32) * 0.02)
        self.proj_w = (jax.random.normal(k_w, (hidden, hidden), jnp.float32)
                       / jnp.sqrt(hidden)).astype(jnp.bfloat16)

    def _pad_after_end(self, tokens):
        """replicates: tokens[b, idx(id_end)+1:] = id_pad (when id_end != id_pad)."""
        if self.id_end == self.id_pad:
            return tokens
        # TODO(synk): torch .index() raises when id_end is absent; argmax->0 here.
        Tn = tokens.shape[-1]
        end_pos = jnp.argmax(tokens == self.id_end, axis=-1)
        pos = jnp.arange(Tn)[None, :]
        return jnp.where(pos > end_pos[:, None], self.id_pad, tokens)

    def process_tokens(self, tokens, multipliers):
        """tokens: (B,T) int32, multipliers: (B,T) f32 -> (B,T,C) f32."""
        return self.forward(tokens[:, None, :], multipliers[:, None, :])

    def forward(self, chunked_tokens, chunked_multipliers):
        """chunked_tokens: (B, n_chunks, T) int32, chunked_multipliers same in f32.
        Returns (B, n_chunks*T, C), matching torch.hstack over per-chunk outputs."""
        B, n_chunks, T = chunked_tokens.shape
        toks = jnp.transpose(chunked_tokens, (1, 0, 2)).astype(jnp.int32)  # (nc,B,T)
        toks = self._pad_after_end(
            toks.reshape(n_chunks * B, T)).reshape(n_chunks, B, T)
        mult = jnp.transpose(chunked_multipliers, (1, 0, 2)).astype(jnp.float32)
        return encode_chunks_pallas(
            toks.reshape(-1), mult, self.proj_w, self.embedding_table,
            batch=B, tokens_per_chunk=T, n_chunks=n_chunks)


# ---------------------------------------------------------------------------
# Pure-JAX reference (mirrors the per-chunk PyTorch semantics)
# ---------------------------------------------------------------------------
def reference_forward(model, chunked_tokens, chunked_multipliers):
    B, n_chunks, T = chunked_tokens.shape
    outs = []
    for i in range(n_chunks):
        toks = model._pad_after_end(chunked_tokens[:, i, :])
        emb = jnp.take(model.embedding_table, toks, axis=0)          # (B,T,C) f32
        z = jnp.einsum("btc,cd->btd", emb.astype(jnp.bfloat16), model.proj_w,
                       preferred_element_type=jnp.float32)
        mult = chunked_multipliers[:, i, :].astype(jnp.float32)
        original_mean = z.mean()
        z = z * mult[..., None]
        z = z * (original_mean / z.mean())
        outs.append(z)
    return jnp.concatenate(outs, axis=1)


# ---------------------------------------------------------------------------
# Demo
# ---------------------------------------------------------------------------
if __name__ == "__main__":
    B, n_chunks = 2, 2
    model = FrozenCLIPEmbedderWithCustomWordsPallas(
        vocab_size=64, hidden=128, chunk_length=6, id_start=0, id_end=1, id_pad=1)
    T = model.tokens_per_chunk  # 8

    key = jax.random.PRNGKey(0)
    k_tok, k_mul = jax.random.split(key)

    # build chunks the way tokenize_line would: [id_start, prompt..., id_end]
    body = jax.random.randint(k_tok, (B, n_chunks, model.chunk_length), 2, 64,
                              dtype=jnp.int32)
    start_col = jnp.full((B, n_chunks, 1), model.id_start, jnp.int32)
    end_col = jnp.full((B, n_chunks, 1), model.id_end, jnp.int32)
    tokens = jnp.concatenate([start_col, body, end_col], axis=-1)      # (B,2,8)

    body_mult = 1.0 + 0.3 * jax.random.normal(
        k_mul, (B, n_chunks, model.chunk_length), jnp.float32)
    one_col = jnp.ones((B, n_chunks, 1), jnp.float32)
    multipliers = jnp.concatenate([one_col, body_mult, one_col], axis=-1)

    out = model.forward(tokens, multipliers)            # (B, n_chunks*T, C)
    out = jax.block_until_ready(out)
    assert out.shape == (B, n_chunks * T, model.hidden)
    assert out.dtype == jnp.float32
    assert bool(jnp.all(jnp.isfinite(out)))

    ref = jax.block_until_ready(reference_forward(model, tokens, multipliers))
    assert jnp.allclose(out, ref, rtol=5e-2, atol=5e-3), float(
        jnp.max(jnp.abs(out - ref)))

    print("KERNEL_OK")
</pallas_src>

<mosaic_0001>
module attributes {stable_mosaic.version = 11 : i64} {
  func.func @kernel(%arg0: i32, %arg1: memref<32xi32, #tpu.memory_space<smem>>, %arg2: memref<1x2x8xf32, #tpu.memory_space<vmem>>, %arg3: memref<128x128xbf16, #tpu.memory_space<vmem>>, %arg4: memref<64x128xf32, #tpu.memory_space<any>>, %arg5: memref<2x8x128xf32, #tpu.memory_space<vmem>>, %arg6: memref<16x128xf32, #tpu.memory_space<vmem>>, %arg7: memref<16x!tpu.dma_semaphore, #tpu.memory_space<semaphore_mem>>) attributes {dimension_semantics = [#tpu.dimension_semantics<parallel>], iteration_bounds = array<i64: 2>, scalar_prefetch = 1 : i64, scratch_operands = 2 : i64, tpu.core_type = #tpu.core_type<tc>, window_params = [{transform_indices = @transform_0, window_bounds = array<i64: 1, 2, 8>}, {pipeline_mode = #tpu.pipeline_mode<synchronous>, transform_indices = @transform_1, window_bounds = array<i64: 128, 128>}, {}, {transform_indices = @transform_3, window_bounds = array<i64: 2, 8, 128>}]} {
    %c16_i32 = arith.constant 16 : i32
    %0 = arith.muli %arg0, %c16_i32 : i32
    %c0_i32 = arith.constant 0 : i32
    %1 = arith.addi %0, %c0_i32 : i32
    %2 = arith.index_cast %1 : i32 to index
    %3 = memref.load %arg1[%2] : memref<32xi32, #tpu.memory_space<smem>>
    %c0_i32_0 = arith.constant 0 : i32
    %c0_i32_1 = arith.constant 0 : i32
    %4 = tpu.memref_slice %arg4[%3, %c0_i32_1] : memref<64x128xf32, #tpu.memory_space<any>> -> memref<1x128xf32, #tpu.memory_space<any>>
    %c0_i32_2 = arith.constant 0 : i32
    %c0_i32_3 = arith.constant 0 : i32
    %5 = tpu.memref_slice %arg6[%c0_i32_2, %c0_i32_3] : memref<16x128xf32, #tpu.memory_space<vmem>> -> memref<1x128xf32, #tpu.memory_space<vmem>>
    %6 = tpu.memref_slice %arg7[%c0_i32_0] : memref<16x!tpu.dma_semaphore, #tpu.memory_space<semaphore_mem>> -> memref<1x!tpu.dma_semaphore, #tpu.memory_space<semaphore_mem>>
    %7 = tpu.memref_squeeze %6 : memref<1x!tpu.dma_semaphore, #tpu.memory_space<semaphore_mem>> -> memref<!tpu.dma_semaphore, #tpu.memory_space<semaphore_mem>>
    tpu.enqueue_dma source(%4 : memref<1x128xf32, #tpu.memory_space<any>>) target(%5 : memref<1x128xf32, #tpu.memory_space<vmem>>) target_semaphore(%7 : memref<!tpu.dma_semaphore, #tpu.memory_space<semaphore_mem>>)
    %c1_i32 = arith.constant 1 : i32
    %8 = arith.addi %0, %c1_i32 : i32
    %9 = arith.index_cast %8 : i32 to index
    %10 = memref.load %arg1[%9] : memref<32xi32, #tpu.memory_space<smem>>
    %c1_i32_4 = arith.constant 1 : i32
    %c0_i32_5 = arith.constant 0 : i32
    %11 = tpu.memref_slice %arg4[%10, %c0_i32_5] : memref<64x128xf32, #tpu.memory_space<any>> -> memref<1x128xf32, #tpu.memory_space<any>>
    %c1_i32_6 = arith.constant 1 : i32
    %c0_i32_7 = arith.constant 0 : i32
    %12 = tpu.memref_slice %arg6[%c1_i32_6, %c0_i32_7] : memref<16x128xf32, #tpu.memory_space<vmem>> -> memref<1x128xf32, #tpu.memory_space<vmem>>
    %13 = tpu.memref_slice %arg7[%c1_i32_4] : memref<16x!tpu.dma_semaphore, #tpu.memory_space<semaphore_mem>> -> memref<1x!tpu.dma_semaphore, #tpu.memory_space<semaphore_mem>>
    %14 = tpu.memref_squeeze %13 : memref<1x!tpu.dma_semaphore, #tpu.memory_space<semaphore_mem>> -> memref<!tpu.dma_semaphore, #tpu.memory_space<semaphore_mem>>
    tpu.enqueue_dma source(%11 : memref<1x128xf32, #tpu.memory_space<any>>) target(%12 : memref<1x128xf32, #tpu.memory_space<vmem>>) target_semaphore(%14 : memref<!tpu.dma_semaphore, #tpu.memory_space<semaphore_mem>>)
    %c2_i32 = arith.constant 2 : i32
    %15 = arith.addi %0, %c2_i32 : i32
    %16 = arith.index_cast %15 : i32 to index
    %17 = memref.load %arg1[%16] : memref<32xi32, #tpu.memory_space<smem>>
    %c2_i32_8 = arith.constant 2 : i32
    %c0_i32_9 = arith.constant 0 : i32
    %18 = tpu.memref_slice %arg4[%17, %c0_i32_9] : memref<64x128xf32, #tpu.memory_space<any>> -> memref<1x128xf32, #tpu.memory_space<any>>
    %c2_i32_10 = arith.constant 2 : i32
    %c0_i32_11 = arith.constant 0 : i32
    %19 = tpu.memref_slice %arg6[%c2_i32_10, %c0_i32_11] : memref<16x128xf32, #tpu.memory_space<vmem>> -> memref<1x128xf32, #tpu.memory_space<vmem>>
    %20 = tpu.memref_slice %arg7[%c2_i32_8] : memref<16x!tpu.dma_semaphore, #tpu.memory_space<semaphore_mem>> -> memref<1x!tpu.dma_semaphore, #tpu.memory_space<semaphore_mem>>
    %21 = tpu.memref_squeeze %20 : memref<1x!tpu.dma_semaphore, #tpu.memory_space<semaphore_mem>> -> memref<!tpu.dma_semaphore, #tpu.memory_space<semaphore_mem>>
    tpu.enqueue_dma source(%18 : memref<1x128xf32, #tpu.memory_space<any>>) target(%19 : memref<1x128xf32, #tpu.memory_space<vmem>>) target_semaphore(%21 : memref<!tpu.dma_semaphore, #tpu.memory_space<semaphore_mem>>)
    %c3_i32 = arith.constant 3 : i32
    %22 = arith.addi %0, %c3_i32 : i32
    %23 = arith.index_cast %22 : i32 to index
    %24 = memref.load %arg1[%23] : memref<32xi32, #tpu.memory_space<smem>>
    %c3_i32_12 = arith.constant 3 : i32
    %c0_i32_13 = arith.constant 0 : i32
    %25 = tpu.memref_slice %arg4[%24, %c0_i32_13] : memref<64x128xf32, #tpu.memory_space<any>> -> memref<1x128xf32, #tpu.memory_space<any>>
    %c3_i32_14 = arith.constant 3 : i32
    %c0_i32_15 = arith.constant 0 : i32
    %26 = tpu.memref_slice %arg6[%c3_i32_14, %c0_i32_15] : memref<16x128xf32, #tpu.memory_space<vmem>> -> memref<1x128xf32, #tpu.memory_space<vmem>>
    %27 = tpu.memref_slice %arg7[%c3_i32_12] : memref<16x!tpu.dma_semaphore, #tpu.memory_space<semaphore_mem>> -> memref<1x!tpu.dma_semaphore, #tpu.memory_space<semaphore_mem>>
    %28 = tpu.memref_squeeze %27 : memref<1x!tpu.dma_semaphore, #tpu.memory_space<semaphore_mem>> -> memref<!tpu.dma_semaphore, #tpu.memory_space<semaphore_mem>>
    tpu.enqueue_dma source(%25 : memref<1x128xf32, #tpu.memory_space<any>>) target(%26 : memref<1x128xf32, #tpu.memory_space<vmem>>) target_semaphore(%28 : memref<!tpu.dma_semaphore, #tpu.memory_space<semaphore_mem>>)
    %c4_i32 = arith.constant 4 : i32
    %29 = arith.addi %0, %c4_i32 : i32
    %30 = arith.index_cast %29 : i32 to index
    %31 = memref.load %arg1[%30] : memref<32xi32, #tpu.memory_space<smem>>
    %c4_i32_16 = arith.constant 4 : i32
    %c0_i32_17 = arith.constant 0 : i32
    %32 = tpu.memref_slice %arg4[%31, %c0_i32_17] : memref<64x128xf32, #tpu.memory_space<any>> -> memref<1x128xf32, #tpu.memory_space<any>>
    %c4_i32_18 = arith.constant 4 : i32
    %c0_i32_19 = arith.constant 0 : i32
    %33 = tpu.memref_slice %arg6[%c4_i32_18, %c0_i32_19] : memref<16x128xf32, #tpu.memory_space<vmem>> -> memref<1x128xf32, #tpu.memory_space<vmem>>
    %34 = tpu.memref_slice %arg7[%c4_i32_16] : memref<16x!tpu.dma_semaphore, #tpu.memory_space<semaphore_mem>> -> memref<1x!tpu.dma_semaphore, #tpu.memory_space<semaphore_mem>>
    %35 = tpu.memref_squeeze %34 : memref<1x!tpu.dma_semaphore, #tpu.memory_space<semaphore_mem>> -> memref<!tpu.dma_semaphore, #tpu.memory_space<semaphore_mem>>
    tpu.enqueue_dma source(%32 : memref<1x128xf32, #tpu.memory_space<any>>) target(%33 : memref<1x128xf32, #tpu.memory_space<vmem>>) target_semaphore(%35 : memref<!tpu.dma_semaphore, #tpu.memory_space<semaphore_mem>>)
    %c5_i32 = arith.constant 5 : i32
    %36 = arith.addi %0, %c5_i32 : i32
    %37 = arith.index_cast %36 : i32 to index
    %38 = memref.load %arg1[%37] : memref<32xi32, #tpu.memory_space<smem>>
    %c5_i32_20 = arith.constant 5 : i32
    %c0_i32_21 = arith.constant 0 : i32
    %39 = tpu.memref_slice %arg4[%38, %c0_i32_21] : memref<64x128xf32, #tpu.memory_space<any>> -> memref<1x128xf32, #tpu.memory_space<any>>
    %c5_i32_22 = arith.constant 5 : i32
    %c0_i32_23 = arith.constant 0 : i32
    %40 = tpu.memref_slice %arg6[%c5_i32_22, %c0_i32_23] : memref<16x128xf32, #tpu.memory_space<vmem>> -> memref<1x128xf32, #tpu.memory_space<vmem>>
    %41 = tpu.memref_slice %arg7[%c5_i32_20] : memref<16x!tpu.dma_semaphore, #tpu.memory_space<semaphore_mem>> -> memref<1x!tpu.dma_semaphore, #tpu.memory_space<semaphore_mem>>
    %42 = tpu.memref_squeeze %41 : memref<1x!tpu.dma_semaphore, #tpu.memory_space<semaphore_mem>> -> memref<!tpu.dma_semaphore, #tpu.memory_space<semaphore_mem>>
    tpu.enqueue_dma source(%39 : memref<1x128xf32, #tpu.memory_space<any>>) target(%40 : memref<1x128xf32, #tpu.memory_space<vmem>>) target_semaphore(%42 : memref<!tpu.dma_semaphore, #tpu.memory_space<semaphore_mem>>)
    %c6_i32 = arith.constant 6 : i32
    %43 = arith.addi %0, %c6_i32 : i32
    %44 = arith.index_cast %43 : i32 to index
    %45 = memref.load %arg1[%44] : memref<32xi32, #tpu.memory_space<smem>>
    %c6_i32_24 = arith.constant 6 : i32
    %c0_i32_25 = arith.constant 0 : i32
    %46 = tpu.memref_slice %arg4[%45, %c0_i32_25] : memref<64x128xf32, #tpu.memory_space<any>> -> memref<1x128xf32, #tpu.memory_space<any>>
    %c6_i32_26 = arith.constant 6 : i32
    %c0_i32_27 = arith.constant 0 : i32
    %47 = tpu.memref_slice %arg6[%c6_i32_26, %c0_i32_27] : memref<16x128xf32, #tpu.memory_space<vmem>> -> memref<1x128xf32, #tpu.memory_space<vmem>>
    %48 = tpu.memref_slice %arg7[%c6_i32_24] : memref<16x!tpu.dma_semaphore, #tpu.memory_space<semaphore_mem>> -> memref<1x!tpu.dma_semaphore, #tpu.memory_space<semaphore_mem>>
    %49 = tpu.memref_squeeze %48 : memref<1x!tpu.dma_semaphore, #tpu.memory_space<semaphore_mem>> -> memref<!tpu.dma_semaphore, #tpu.memory_space<semaphore_mem>>
    tpu.enqueue_dma source(%46 : memref<1x128xf32, #tpu.memory_space<any>>) target(%47 : memref<1x128xf32, #tpu.memory_space<vmem>>) target_semaphore(%49 : memref<!tpu.dma_semaphore, #tpu.memory_space<semaphore_mem>>)
    %c7_i32 = arith.constant 7 : i32
    %50 = arith.addi %0, %c7_i32 : i32
    %51 = arith.index_cast %50 : i32 to index
    %52 = memref.load %arg1[%51] : memref<32xi32, #tpu.memory_space<smem>>
    %c7_i32_28 = arith.constant 7 : i32
    %c0_i32_29 = arith.constant 0 : i32
    %53 = tpu.memref_slice %arg4[%52, %c0_i32_29] : memref<64x128xf32, #tpu.memory_space<any>> -> memref<1x128xf32, #tpu.memory_space<any>>
    %c7_i32_30 = arith.constant 7 : i32
    %c0_i32_31 = arith.constant 0 : i32
    %54 = tpu.memref_slice %arg6[%c7_i32_30, %c0_i32_31] : memref<16x128xf32, #tpu.memory_space<vmem>> -> memref<1x128xf32, #tpu.memory_space<vmem>>
    %55 = tpu.memref_slice %arg7[%c7_i32_28] : memref<16x!tpu.dma_semaphore, #tpu.memory_space<semaphore_mem>> -> memref<1x!tpu.dma_semaphore, #tpu.memory_space<semaphore_mem>>
    %56 = tpu.memref_squeeze %55 : memref<1x!tpu.dma_semaphore, #tpu.memory_space<semaphore_mem>> -> memref<!tpu.dma_semaphore, #tpu.memory_space<semaphore_mem>>
    tpu.enqueue_dma source(%53 : memref<1x128xf32, #tpu.memory_space<any>>) target(%54 : memref<1x128xf32, #tpu.memory_space<vmem>>) target_semaphore(%56 : memref<!tpu.dma_semaphore, #tpu.memory_space<semaphore_mem>>)
    %c8_i32 = arith.constant 8 : i32
    %57 = arith.addi %0, %c8_i32 : i32
    %58 = arith.index_cast %57 : i32 to index
    %59 = memref.load %arg1[%58] : memref<32xi32, #tpu.memory_space<smem>>
    %c8_i32_32 = arith.constant 8 : i32
    %c0_i32_33 = arith.constant 0 : i32
    %60 = tpu.memref_slice %arg4[%59, %c0_i32_33] : memref<64x128xf32, #tpu.memory_space<any>> -> memref<1x128xf32, #tpu.memory_space<any>>
    %c8_i32_34 = arith.constant 8 : i32
    %c0_i32_35 = arith.constant 0 : i32
    %61 = tpu.memref_slice %arg6[%c8_i32_34, %c0_i32_35] : memref<16x128xf32, #tpu.memory_space<vmem>> -> memref<1x128xf32, #tpu.memory_space<vmem>>
    %62 = tpu.memref_slice %arg7[%c8_i32_32] : memref<16x!tpu.dma_semaphore, #tpu.memory_space<semaphore_mem>> -> memref<1x!tpu.dma_semaphore, #tpu.memory_space<semaphore_mem>>
    %63 = tpu.memref_squeeze %62 : memref<1x!tpu.dma_semaphore, #tpu.memory_space<semaphore_mem>> -> memref<!tpu.dma_semaphore, #tpu.memory_space<semaphore_mem>>
    tpu.enqueue_dma source(%60 : memref<1x128xf32, #tpu.memory_space<any>>) target(%61 : memref<1x128xf32, #tpu.memory_space<vmem>>) target_semaphore(%63 : memref<!tpu.dma_semaphore, #tpu.memory_space<semaphore_mem>>)
    %c9_i32 = arith.constant 9 : i32
    %64 = arith.addi %0, %c9_i32 : i32
    %65 = arith.index_cast %64 : i32 to index
    %66 = memref.load %arg1[%65] : memref<32xi32, #tpu.memory_space<smem>>
    %c9_i32_36 = arith.constant 9 : i32
    %c0_i32_37 = arith.constant 0 : i32
    %67 = tpu.memref_slice %arg4[%66, %c0_i32_37] : memref<64x128xf32, #tpu.memory_space<any>> -> memref<1x128xf32, #tpu.memory_space<any>>
    %c9_i32_38 = arith.constant 9 : i32
    %c0_i32_39 = arith.constant 0 : i32
    %68 = tpu.memref_slice %arg6[%c9_i32_38, %c0_i32_39] : memref<16x128xf32, #tpu.memory_space<vmem>> -> memref<1x128xf32, #tpu.memory_space<vmem>>
    %69 = tpu.memref_slice %arg7[%c9_i32_36] : memref<16x!tpu.dma_semaphore, #tpu.memory_space<semaphore_mem>> -> memref<1x!tpu.dma_semaphore, #tpu.memory_space<semaphore_mem>>
    %70 = tpu.memref_squeeze %69 : memref<1x!tpu.dma_semaphore, #tpu.memory_space<semaphore_mem>> -> memref<!tpu.dma_semaphore, #tpu.memory_space<semaphore_mem>>
    tpu.enqueue_dma source(%67 : memref<1x128xf32, #tpu.memory_space<any>>) target(%68 : memref<1x128xf32, #tpu.memory_space<vmem>>) target_semaphore(%70 : memref<!tpu.dma_semaphore, #tpu.memory_space<semaphore_mem>>)
    %c10_i32 = arith.constant 10 : i32
    %71 = arith.addi %0, %c10_i32 : i32
    %72 = arith.index_cast %71 : i32 to index
    %73 = memref.load %arg1[%72] : memref<32xi32, #tpu.memory_space<smem>>
    %c10_i32_40 = arith.constant 10 : i32
    %c0_i32_41 = arith.constant 0 : i32
    %74 = tpu.memref_slice %arg4[%73, %c0_i32_41] : memref<64x128xf32, #tpu.memory_space<any>> -> memref<1x128xf32, #tpu.memory_space<any>>
    %c10_i32_42 = arith.constant 10 : i32
    %c0_i32_43 = arith.constant 0 : i32
    %75 = tpu.memref_slice %arg6[%c10_i32_42, %c0_i32_43] : memref<16x128xf32, #tpu.memory_space<vmem>> -> memref<1x128xf32, #tpu.memory_space<vmem>>
    %76 = tpu.memref_slice %arg7[%c10_i32_40] : memref<16x!tpu.dma_semaphore, #tpu.memory_space<semaphore_mem>> -> memref<1x!tpu.dma_semaphore, #tpu.memory_space<semaphore_mem>>
    %77 = tpu.memref_squeeze %76 : memref<1x!tpu.dma_semaphore, #tpu.memory_space<semaphore_mem>> -> memref<!tpu.dma_semaphore, #tpu.memory_space<semaphore_mem>>
    tpu.enqueue_dma source(%74 : memref<1x128xf32, #tpu.memory_space<any>>) target(%75 : memref<1x128xf32, #tpu.memory_space<vmem>>) target_semaphore(%77 : memref<!tpu.dma_semaphore, #tpu.memory_space<semaphore_mem>>)
    %c11_i32 = arith.constant 11 : i32
    %78 = arith.addi %0, %c11_i32 : i32
    %79 = arith.index_cast %78 : i32 to index
    %80 = memref.load %arg1[%79] : memref<32xi32, #tpu.memory_space<smem>>
    %c11_i32_44 = arith.constant 11 : i32
    %c0_i32_45 = arith.constant 0 : i32
    %81 = tpu.memref_slice %arg4[%80, %c0_i32_45] : memref<64x128xf32, #tpu.memory_space<any>> -> memref<1x128xf32, #tpu.memory_space<any>>
    %c11_i32_46 = arith.constant 11 : i32
    %c0_i32_47 = arith.constant 0 : i32
    %82 = tpu.memref_slice %arg6[%c11_i32_46, %c0_i32_47] : memref<16x128xf32, #tpu.memory_space<vmem>> -> memref<1x128xf32, #tpu.memory_space<vmem>>
    %83 = tpu.memref_slice %arg7[%c11_i32_44] : memref<16x!tpu.dma_semaphore, #tpu.memory_space<semaphore_mem>> -> memref<1x!tpu.dma_semaphore, #tpu.memory_space<semaphore_mem>>
    %84 = tpu.memref_squeeze %83 : memref<1x!tpu.dma_semaphore, #tpu.memory_space<semaphore_mem>> -> memref<!tpu.dma_semaphore, #tpu.memory_space<semaphore_mem>>
    tpu.enqueue_dma source(%81 : memref<1x128xf32, #tpu.memory_space<any>>) target(%82 : memref<1x128xf32, #tpu.memory_space<vmem>>) target_semaphore(%84 : memref<!tpu.dma_semaphore, #tpu.memory_space<semaphore_mem>>)
    %c12_i32 = arith.constant 12 : i32
    %85 = arith.addi %0, %c12_i32 : i32
    %86 = arith.index_cast %85 : i32 to index
    %87 = memref.load %arg1[%86] : memref<32xi32, #tpu.memory_space<smem>>
    %c12_i32_48 = arith.constant 12 : i32
    %c0_i32_49 = arith.constant 0 : i32
    %88 = tpu.memref_slice %arg4[%87, %c0_i32_49] : memref<64x128xf32, #tpu.memory_space<any>> -> memref<1x128xf32, #tpu.memory_space<any>>
    %c12_i32_50 = arith.constant 12 : i32
    %c0_i32_51 = arith.constant 0 : i32
    %89 = tpu.memref_slice %arg6[%c12_i32_50, %c0_i32_51] : memref<16x128xf32, #tpu.memory_space<vmem>> -> memref<1x128xf32, #tpu.memory_space<vmem>>
    %90 = tpu.memref_slice %arg7[%c12_i32_48] : memref<16x!tpu.dma_semaphore, #tpu.memory_space<semaphore_mem>> -> memref<1x!tpu.dma_semaphore, #tpu.memory_space<semaphore_mem>>
    %91 = tpu.memref_squeeze %90 : memref<1x!tpu.dma_semaphore, #tpu.memory_space<semaphore_mem>> -> memref<!tpu.dma_semaphore, #tpu.memory_space<semaphore_mem>>
    tpu.enqueue_dma source(%88 : memref<1x128xf32, #tpu.memory_space<any>>) target(%89 : memref<1x128xf32, #tpu.memory_space<vmem>>) target_semaphore(%91 : memref<!tpu.dma_semaphore, #tpu.memory_space<semaphore_mem>>)
    %c13_i32 = arith.constant 13 : i32
    %92 = arith.addi %0, %c13_i32 : i32
    %93 = arith.index_cast %92 : i32 to index
    %94 = memref.load %arg1[%93] : memref<32xi32, #tpu.memory_space<smem>>
    %c13_i32_52 = arith.constant 13 : i32
    %c0_i32_53 = arith.constant 0 : i32
    %95 = tpu.memref_slice %arg4[%94, %c0_i32_53] : memref<64x128xf32, #tpu.memory_space<any>> -> memref<1x128xf32, #tpu.memory_space<any>>
    %c13_i32_54 = arith.constant 13 : i32
    %c0_i32_55 = arith.constant 0 : i32
    %96 = tpu.memref_slice %arg6[%c13_i32_54, %c0_i32_55] : memref<16x128xf32, #tpu.memory_space<vmem>> -> memref<1x128xf32, #tpu.memory_space<vmem>>
    %97 = tpu.memref_slice %arg7[%c13_i32_52] : memref<16x!tpu.dma_semaphore, #tpu.memory_space<semaphore_mem>> -> memref<1x!tpu.dma_semaphore, #tpu.memory_space<semaphore_mem>>
    %98 = tpu.memref_squeeze %97 : memref<1x!tpu.dma_semaphore, #tpu.memory_space<semaphore_mem>> -> memref<!tpu.dma_semaphore, #tpu.memory_space<semaphore_mem>>
    tpu.enqueue_dma source(%95 : memref<1x128xf32, #tpu.memory_space<any>>) target(%96 : memref<1x128xf32, #tpu.memory_space<vmem>>) target_semaphore(%98 : memref<!tpu.dma_semaphore, #tpu.memory_space<semaphore_mem>>)
    %c14_i32 = arith.constant 14 : i32
    %99 = arith.addi %0, %c14_i32 : i32
    %100 = arith.index_cast %99 : i32 to index
    %101 = memref.load %arg1[%100] : memref<32xi32, #tpu.memory_space<smem>>
    %c14_i32_56 = arith.constant 14 : i32
    %c0_i32_57 = arith.constant 0 : i32
    %102 = tpu.memref_slice %arg4[%101, %c0_i32_57] : memref<64x128xf32, #tpu.memory_space<any>> -> memref<1x128xf32, #tpu.memory_space<any>>
    %c14_i32_58 = arith.constant 14 : i32
    %c0_i32_59 = arith.constant 0 : i32
    %103 = tpu.memref_slice %arg6[%c14_i32_58, %c0_i32_59] : memref<16x128xf32, #tpu.memory_space<vmem>> -> memref<1x128xf32, #tpu.memory_space<vmem>>
    %104 = tpu.memref_slice %arg7[%c14_i32_56] : memref<16x!tpu.dma_semaphore, #tpu.memory_space<semaphore_mem>> -> memref<1x!tpu.dma_semaphore, #tpu.memory_space<semaphore_mem>>
    %105 = tpu.memref_squeeze %104 : memref<1x!tpu.dma_semaphore, #tpu.memory_space<semaphore_mem>> -> memref<!tpu.dma_semaphore, #tpu.memory_space<semaphore_mem>>
    tpu.enqueue_dma source(%102 : memref<1x128xf32, #tpu.memory_space<any>>) target(%103 : memref<1x128xf32, #tpu.memory_space<vmem>>) target_semaphore(%105 : memref<!tpu.dma_semaphore, #tpu.memory_space<semaphore_mem>>)
    %c15_i32 = arith.constant 15 : i32
    %106 = arith.addi %0, %c15_i32 : i32
    %107 = arith.index_cast %106 : i32 to index
    %108 = memref.load %arg1[%107] : memref<32xi32, #tpu.memory_space<smem>>
    %c15_i32_60 = arith.constant 15 : i32
    %c0_i32_61 = arith.constant 0 : i32
    %109 = tpu.memref_slice %arg4[%108, %c0_i32_61] : memref<64x128xf32, #tpu.memory_space<any>> -> memref<1x128xf32, #tpu.memory_space<any>>
    %c15_i32_62 = arith.constant 15 : i32
    %c0_i32_63 = arith.constant 0 : i32
    %110 = tpu.memref_slice %arg6[%c15_i32_62, %c0_i32_63] : memref<16x128xf32, #tpu.memory_space<vmem>> -> memref<1x128xf32, #tpu.memory_space<vmem>>
    %111 = tpu.memref_slice %arg7[%c15_i32_60] : memref<16x!tpu.dma_semaphore, #tpu.memory_space<semaphore_mem>> -> memref<1x!tpu.dma_semaphore, #tpu.memory_space<semaphore_mem>>
    %112 = tpu.memref_squeeze %111 : memref<1x!tpu.dma_semaphore, #tpu.memory_space<semaphore_mem>> -> memref<!tpu.dma_semaphore, #tpu.memory_space<semaphore_mem>>
    tpu.enqueue_dma source(%109 : memref<1x128xf32, #tpu.memory_space<any>>) target(%110 : memref<1x128xf32, #tpu.memory_space<vmem>>) target_semaphore(%112 : memref<!tpu.dma_semaphore, #tpu.memory_space<semaphore_mem>>)
    %c0_i32_64 = arith.constant 0 : i32
    %c0_i32_65 = arith.constant 0 : i32
    %c0_i32_66 = arith.constant 0 : i32
    %113 = tpu.memref_slice %arg4[%c0_i32_65, %c0_i32_66] : memref<64x128xf32, #tpu.memory_space<any>> -> memref<1x128xf32, #tpu.memory_space<any>>
    %c0_i32_67 = arith.constant 0 : i32
    %c0_i32_68 = arith.constant 0 : i32
    %114 = tpu.memref_slice %arg6[%c0_i32_67, %c0_i32_68] : memref<16x128xf32, #tpu.memory_space<vmem>> -> memref<1x128xf32, #tpu.memory_space<vmem>>
    %115 = tpu.memref_slice %arg7[%c0_i32_64] : memref<16x!tpu.dma_semaphore, #tpu.memory_space<semaphore_mem>> -> memref<1x!tpu.dma_semaphore, #tpu.memory_space<semaphore_mem>>
    %116 = tpu.memref_squeeze %115 : memref<1x!tpu.dma_semaphore, #tpu.memory_space<semaphore_mem>> -> memref<!tpu.dma_semaphore, #tpu.memory_space<semaphore_mem>>
    tpu.wait_dma2 semaphore(%116 : memref<!tpu.dma_semaphore, #tpu.memory_space<semaphore_mem>>) src(%113 : memref<1x128xf32, #tpu.memory_space<any>>) dst(%114 : memref<1x128xf32, #tpu.memory_space<vmem>>)
    %c1_i32_69 = arith.constant 1 : i32
    %c0_i32_70 = arith.constant 0 : i32
    %c0_i32_71 = arith.constant 0 : i32
    %117 = tpu.memref_slice %arg4[%c0_i32_70, %c0_i32_71] : memref<64x128xf32, #tpu.memory_space<any>> -> memref<1x128xf32, #tpu.memory_space<any>>
    %c1_i32_72 = arith.constant 1 : i32
    %c0_i32_73 = arith.constant 0 : i32
    %118 = tpu.memref_slice %arg6[%c1_i32_72, %c0_i32_73] : memref<16x128xf32, #tpu.memory_space<vmem>> -> memref<1x128xf32, #tpu.memory_space<vmem>>
    %119 = tpu.memref_slice %arg7[%c1_i32_69] : memref<16x!tpu.dma_semaphore, #tpu.memory_space<semaphore_mem>> -> memref<1x!tpu.dma_semaphore, #tpu.memory_space<semaphore_mem>>
    %120 = tpu.memref_squeeze %119 : memref<1x!tpu.dma_semaphore, #tpu.memory_space<semaphore_mem>> -> memref<!tpu.dma_semaphore, #tpu.memory_space<semaphore_mem>>
    tpu.wait_dma2 semaphore(%120 : memref<!tpu.dma_semaphore, #tpu.memory_space<semaphore_mem>>) src(%117 : memref<1x128xf32, #tpu.memory_space<any>>) dst(%118 : memref<1x128xf32, #tpu.memory_space<vmem>>)
    %c2_i32_74 = arith.constant 2 : i32
    %c0_i32_75 = arith.constant 0 : i32
    %c0_i32_76 = arith.constant 0 : i32
    %121 = tpu.memref_slice %arg4[%c0_i32_75, %c0_i32_76] : memref<64x128xf32, #tpu.memory_space<any>> -> memref<1x128xf32, #tpu.memory_space<any>>
    %c2_i32_77 = arith.constant 2 : i32
    %c0_i32_78 = arith.constant 0 : i32
    %122 = tpu.memref_slice %arg6[%c2_i32_77, %c0_i32_78] : memref<16x128xf32, #tpu.memory_space<vmem>> -> memref<1x128xf32, #tpu.memory_space<vmem>>
    %123 = tpu.memref_slice %arg7[%c2_i32_74] : memref<16x!tpu.dma_semaphore, #tpu.memory_space<semaphore_mem>> -> memref<1x!tpu.dma_semaphore, #tpu.memory_space<semaphore_mem>>
    %124 = tpu.memref_squeeze %123 : memref<1x!tpu.dma_semaphore, #tpu.memory_space<semaphore_mem>> -> memref<!tpu.dma_semaphore, #tpu.memory_space<semaphore_mem>>
    tpu.wait_dma2 semaphore(%124 : memref<!tpu.dma_semaphore, #tpu.memory_space<semaphore_mem>>) src(%121 : memref<1x128xf32, #tpu.memory_space<any>>) dst(%122 : memref<1x128xf32, #tpu.memory_space<vmem>>)
    %c3_i32_79 = arith.constant 3 : i32
    %c0_i32_80 = arith.constant 0 : i32
    %c0_i32_81 = arith.constant 0 : i32
    %125 = tpu.memref_slice %arg4[%c0_i32_80, %c0_i32_81] : memref<64x128xf32, #tpu.memory_space<any>> -> memref<1x128xf32, #tpu.memory_space<any>>
    %c3_i32_82 = arith.constant 3 : i32
    %c0_i32_83 = arith.constant 0 : i32
    %126 = tpu.memref_slice %arg6[%c3_i32_82, %c0_i32_83] : memref<16x128xf32, #tpu.memory_space<vmem>> -> memref<1x128xf32, #tpu.memory_space<vmem>>
    %127 = tpu.memref_slice %arg7[%c3_i32_79] : memref<16x!tpu.dma_semaphore, #tpu.memory_space<semaphore_mem>> -> memref<1x!tpu.dma_semaphore, #tpu.memory_space<semaphore_mem>>
    %128 = tpu.memref_squeeze %127 : memref<1x!tpu.dma_semaphore, #tpu.memory_space<semaphore_mem>> -> memref<!tpu.dma_semaphore, #tpu.memory_space<semaphore_mem>>
    tpu.wait_dma2 semaphore(%128 : memref<!tpu.dma_semaphore, #tpu.memory_space<semaphore_mem>>) src(%125 : memref<1x128xf32, #tpu.memory_space<any>>) dst(%126 : memref<1x128xf32, #tpu.memory_space<vmem>>)
    %c4_i32_84 = arith.constant 4 : i32
    %c0_i32_85 = arith.constant 0 : i32
    %c0_i32_86 = arith.constant 0 : i32
    %129 = tpu.memref_slice %arg4[%c0_i32_85, %c0_i32_86] : memref<64x128xf32, #tpu.memory_space<any>> -> memref<1x128xf32, #tpu.memory_space<any>>
    %c4_i32_87 = arith.constant 4 : i32
    %c0_i32_88 = arith.constant 0 : i32
    %130 = tpu.memref_slice %arg6[%c4_i32_87, %c0_i32_88] : memref<16x128xf32, #tpu.memory_space<vmem>> -> memref<1x128xf32, #tpu.memory_space<vmem>>
    %131 = tpu.memref_slice %arg7[%c4_i32_84] : memref<16x!tpu.dma_semaphore, #tpu.memory_space<semaphore_mem>> -> memref<1x!tpu.dma_semaphore, #tpu.memory_space<semaphore_mem>>
    %132 = tpu.memref_squeeze %131 : memref<1x!tpu.dma_semaphore, #tpu.memory_space<semaphore_mem>> -> memref<!tpu.dma_semaphore, #tpu.memory_space<semaphore_mem>>
    tpu.wait_dma2 semaphore(%132 : memref<!tpu.dma_semaphore, #tpu.memory_space<semaphore_mem>>) src(%129 : memref<1x128xf32, #tpu.memory_space<any>>) dst(%130 : memref<1x128xf32, #tpu.memory_space<vmem>>)
    %c5_i32_89 = arith.constant 5 : i32
    %c0_i32_90 = arith.constant 0 : i32
    %c0_i32_91 = arith.constant 0 : i32
    %133 = tpu.memref_slice %arg4[%c0_i32_90, %c0_i32_91] : memref<64x128xf32, #tpu.memory_space<any>> -> memref<1x128xf32, #tpu.memory_space<any>>
    %c5_i32_92 = arith.constant 5 : i32
    %c0_i32_93 = arith.constant 0 : i32
    %134 = tpu.memref_slice %arg6[%c5_i32_92, %c0_i32_93] : memref<16x128xf32, #tpu.memory_space<vmem>> -> memref<1x128xf32, #tpu.memory_space<vmem>>
    %135 = tpu.memref_slice %arg7[%c5_i32_89] : memref<16x!tpu.dma_semaphore, #tpu.memory_space<semaphore_mem>> -> memref<1x!tpu.dma_semaphore, #tpu.memory_space<semaphore_mem>>
    %136 = tpu.memref_squeeze %135 : memref<1x!tpu.dma_semaphore, #tpu.memory_space<semaphore_mem>> -> memref<!tpu.dma_semaphore, #tpu.memory_space<semaphore_mem>>
    tpu.wait_dma2 semaphore(%136 : memref<!tpu.dma_semaphore, #tpu.memory_space<semaphore_mem>>) src(%133 : memref<1x128xf32, #tpu.memory_space<any>>) dst(%134 : memref<1x128xf32, #tpu.memory_space<vmem>>)
    %c6_i32_94 = arith.constant 6 : i32
    %c0_i32_95 = arith.constant 0 : i32
    %c0_i32_96 = arith.constant 0 : i32
    %137 = tpu.memref_slice %arg4[%c0_i32_95, %c0_i32_96] : memref<64x128xf32, #tpu.memory_space<any>> -> memref<1x128xf32, #tpu.memory_space<any>>
    %c6_i32_97 = arith.constant 6 : i32
    %c0_i32_98 = arith.constant 0 : i32
    %138 = tpu.memref_slice %arg6[%c6_i32_97, %c0_i32_98] : memref<16x128xf32, #tpu.memory_space<vmem>> -> memref<1x128xf32, #tpu.memory_space<vmem>>
    %139 = tpu.memref_slice %arg7[%c6_i32_94] : memref<16x!tpu.dma_semaphore, #tpu.memory_space<semaphore_mem>> -> memref<1x!tpu.dma_semaphore, #tpu.memory_space<semaphore_mem>>
    %140 = tpu.memref_squeeze %139 : memref<1x!tpu.dma_semaphore, #tpu.memory_space<semaphore_mem>> -> memref<!tpu.dma_semaphore, #tpu.memory_space<semaphore_mem>>
    tpu.wait_dma2 semaphore(%140 : memref<!tpu.dma_semaphore, #tpu.memory_space<semaphore_mem>>) src(%137 : memref<1x128xf32, #tpu.memory_space<any>>) dst(%138 : memref<1x128xf32, #tpu.memory_space<vmem>>)
    %c7_i32_99 = arith.constant 7 : i32
    %c0_i32_100 = arith.constant 0 : i32
    %c0_i32_101 = arith.constant 0 : i32
    %141 = tpu.memref_slice %arg4[%c0_i32_100, %c0_i32_101] : memref<64x128xf32, #tpu.memory_space<any>> -> memref<1x128xf32, #tpu.memory_space<any>>
    %c7_i32_102 = arith.constant 7 : i32
    %c0_i32_103 = arith.constant 0 : i32
    %142 = tpu.memref_slice %arg6[%c7_i32_102, %c0_i32_103] : memref<16x128xf32, #tpu.memory_space<vmem>> -> memref<1x128xf32, #tpu.memory_space<vmem>>
    %143 = tpu.memref_slice %arg7[%c7_i32_99] : memref<16x!tpu.dma_semaphore, #tpu.memory_space<semaphore_mem>> -> memref<1x!tpu.dma_semaphore, #tpu.memory_space<semaphore_mem>>
    %144 = tpu.memref_squeeze %143 : memref<1x!tpu.dma_semaphore, #tpu.memory_space<semaphore_mem>> -> memref<!tpu.dma_semaphore, #tpu.memory_space<semaphore_mem>>
    tpu.wait_dma2 semaphore(%144 : memref<!tpu.dma_semaphore, #tpu.memory_space<semaphore_mem>>) src(%141 : memref<1x128xf32, #tpu.memory_space<any>>) dst(%142 : memref<1x128xf32, #tpu.memory_space<vmem>>)
    %c8_i32_104 = arith.constant 8 : i32
    %c0_i32_105 = arith.constant 0 : i32
    %c0_i32_106 = arith.constant 0 : i32
    %145 = tpu.memref_slice %arg4[%c0_i32_105, %c0_i32_106] : memref<64x128xf32, #tpu.memory_space<any>> -> memref<1x128xf32, #tpu.memory_space<any>>
    %c8_i32_107 = arith.constant 8 : i32
    %c0_i32_108 = arith.constant 0 : i32
    %146 = tpu.memref_slice %arg6[%c8_i32_107, %c0_i32_108] : memref<16x128xf32, #tpu.memory_space<vmem>> -> memref<1x128xf32, #tpu.memory_space<vmem>>
    %147 = tpu.memref_slice %arg7[%c8_i32_104] : memref<16x!tpu.dma_semaphore, #tpu.memory_space<semaphore_mem>> -> memref<1x!tpu.dma_semaphore, #tpu.memory_space<semaphore_mem>>
    %148 = tpu.memref_squeeze %147 : memref<1x!tpu.dma_semaphore, #tpu.memory_space<semaphore_mem>> -> memref<!tpu.dma_semaphore, #tpu.memory_space<semaphore_mem>>
    tpu.wait_dma2 semaphore(%148 : memref<!tpu.dma_semaphore, #tpu.memory_space<semaphore_mem>>) src(%145 : memref<1x128xf32, #tpu.memory_space<any>>) dst(%146 : memref<1x128xf32, #tpu.memory_space<vmem>>)
    %c9_i32_109 = arith.constant 9 : i32
    %c0_i32_110 = arith.constant 0 : i32
    %c0_i32_111 = arith.constant 0 : i32
    %149 = tpu.memref_slice %arg4[%c0_i32_110, %c0_i32_111] : memref<64x128xf32, #tpu.memory_space<any>> -> memref<1x128xf32, #tpu.memory_space<any>>
    %c9_i32_112 = arith.constant 9 : i32
    %c0_i32_113 = arith.constant 0 : i32
    %150 = tpu.memref_slice %arg6[%c9_i32_112, %c0_i32_113] : memref<16x128xf32, #tpu.memory_space<vmem>> -> memref<1x128xf32, #tpu.memory_space<vmem>>
    %151 = tpu.memref_slice %arg7[%c9_i32_109] : memref<16x!tpu.dma_semaphore, #tpu.memory_space<semaphore_mem>> -> memref<1x!tpu.dma_semaphore, #tpu.memory_space<semaphore_mem>>
    %152 = tpu.memref_squeeze %151 : memref<1x!tpu.dma_semaphore, #tpu.memory_space<semaphore_mem>> -> memref<!tpu.dma_semaphore, #tpu.memory_space<semaphore_mem>>
    tpu.wait_dma2 semaphore(%152 : memref<!tpu.dma_semaphore, #tpu.memory_space<semaphore_mem>>) src(%149 : memref<1x128xf32, #tpu.memory_space<any>>) dst(%150 : memref<1x128xf32, #tpu.memory_space<vmem>>)
    %c10_i32_114 = arith.constant 10 : i32
    %c0_i32_115 = arith.constant 0 : i32
    %c0_i32_116 = arith.constant 0 : i32
    %153 = tpu.memref_slice %arg4[%c0_i32_115, %c0_i32_116] : memref<64x128xf32, #tpu.memory_space<any>> -> memref<1x128xf32, #tpu.memory_space<any>>
    %c10_i32_117 = arith.constant 10 : i32
    %c0_i32_118 = arith.constant 0 : i32
    %154 = tpu.memref_slice %arg6[%c10_i32_117, %c0_i32_118] : memref<16x128xf32, #tpu.memory_space<vmem>> -> memref<1x128xf32, #tpu.memory_space<vmem>>
    %155 = tpu.memref_slice %arg7[%c10_i32_114] : memref<16x!tpu.dma_semaphore, #tpu.memory_space<semaphore_mem>> -> memref<1x!tpu.dma_semaphore, #tpu.memory_space<semaphore_mem>>
    %156 = tpu.memref_squeeze %155 : memref<1x!tpu.dma_semaphore, #tpu.memory_space<semaphore_mem>> -> memref<!tpu.dma_semaphore, #tpu.memory_space<semaphore_mem>>
    tpu.wait_dma2 semaphore(%156 : memref<!tpu.dma_semaphore, #tpu.memory_space<semaphore_mem>>) src(%153 : memref<1x128xf32, #tpu.memory_space<any>>) dst(%154 : memref<1x128xf32, #tpu.memory_space<vmem>>)
    %c11_i32_119 = arith.constant 11 : i32
    %c0_i32_120 = arith.constant 0 : i32
    %c0_i32_121 = arith.constant 0 : i32
    %157 = tpu.memref_slice %arg4[%c0_i32_120, %c0_i32_121] : memref<64x128xf32, #tpu.memory_space<any>> -> memref<1x128xf32, #tpu.memory_space<any>>
    %c11_i32_122 = arith.constant 11 : i32
    %c0_i32_123 = arith.constant 0 : i32
    %158 = tpu.memref_slice %arg6[%c11_i32_122, %c0_i32_123] : memref<16x128xf32, #tpu.memory_space<vmem>> -> memref<1x128xf32, #tpu.memory_space<vmem>>
    %159 = tpu.memref_slice %arg7[%c11_i32_119] : memref<16x!tpu.dma_semaphore, #tpu.memory_space<semaphore_mem>> -> memref<1x!tpu.dma_semaphore, #tpu.memory_space<semaphore_mem>>
    %160 = tpu.memref_squeeze %159 : memref<1x!tpu.dma_semaphore, #tpu.memory_space<semaphore_mem>> -> memref<!tpu.dma_semaphore, #tpu.memory_space<semaphore_mem>>
    tpu.wait_dma2 semaphore(%160 : memref<!tpu.dma_semaphore, #tpu.memory_space<semaphore_mem>>) src(%157 : memref<1x128xf32, #tpu.memory_space<any>>) dst(%158 : memref<1x128xf32, #tpu.memory_space<vmem>>)
    %c12_i32_124 = arith.constant 12 : i32
    %c0_i32_125 = arith.constant 0 : i32
    %c0_i32_126 = arith.constant 0 : i32
    %161 = tpu.memref_slice %arg4[%c0_i32_125, %c0_i32_126] : memref<64x128xf32, #tpu.memory_space<any>> -> memref<1x128xf32, #tpu.memory_space<any>>
    %c12_i32_127 = arith.constant 12 : i32
    %c0_i32_128 = arith.constant 0 : i32
    %162 = tpu.memref_slice %arg6[%c12_i32_127, %c0_i32_128] : memref<16x128xf32, #tpu.memory_space<vmem>> -> memref<1x128xf32, #tpu.memory_space<vmem>>
    %163 = tpu.memref_slice %arg7[%c12_i32_124] : memref<16x!tpu.dma_semaphore, #tpu.memory_space<semaphore_mem>> -> memref<1x!tpu.dma_semaphore, #tpu.memory_space<semaphore_mem>>
    %164 = tpu.memref_squeeze %163 : memref<1x!tpu.dma_semaphore, #tpu.memory_space<semaphore_mem>> -> memref<!tpu.dma_semaphore, #tpu.memory_space<semaphore_mem>>
    tpu.wait_dma2 semaphore(%164 : memref<!tpu.dma_semaphore, #tpu.memory_space<semaphore_mem>>) src(%161 : memref<1x128xf32, #tpu.memory_space<any>>) dst(%162 : memref<1x128xf32, #tpu.memory_space<vmem>>)
    %c13_i32_129 = arith.constant 13 : i32
    %c0_i32_130 = arith.constant 0 : i32
    %c0_i32_131 = arith.constant 0 : i32
    %165 = tpu.memref_slice %arg4[%c0_i32_130, %c0_i32_131] : memref<64x128xf32, #tpu.memory_space<any>> -> memref<1x128xf32, #tpu.memory_space<any>>
    %c13_i32_132 = arith.constant 13 : i32
    %c0_i32_133 = arith.constant 0 : i32
    %166 = tpu.memref_slice %arg6[%c13_i32_132, %c0_i32_133] : memref<16x128xf32, #tpu.memory_space<vmem>> -> memref<1x128xf32, #tpu.memory_space<vmem>>
    %167 = tpu.memref_slice %arg7[%c13_i32_129] : memref<16x!tpu.dma_semaphore, #tpu.memory_space<semaphore_mem>> -> memref<1x!tpu.dma_semaphore, #tpu.memory_space<semaphore_mem>>
    %168 = tpu.memref_squeeze %167 : memref<1x!tpu.dma_semaphore, #tpu.memory_space<semaphore_mem>> -> memref<!tpu.dma_semaphore, #tpu.memory_space<semaphore_mem>>
    tpu.wait_dma2 semaphore(%168 : memref<!tpu.dma_semaphore, #tpu.memory_space<semaphore_mem>>) src(%165 : memref<1x128xf32, #tpu.memory_space<any>>) dst(%166 : memref<1x128xf32, #tpu.memory_space<vmem>>)
    %c14_i32_134 = arith.constant 14 : i32
    %c0_i32_135 = arith.constant 0 : i32
    %c0_i32_136 = arith.constant 0 : i32
    %169 = tpu.memref_slice %arg4[%c0_i32_135, %c0_i32_136] : memref<64x128xf32, #tpu.memory_space<any>> -> memref<1x128xf32, #tpu.memory_space<any>>
    %c14_i32_137 = arith.constant 14 : i32
    %c0_i32_138 = arith.constant 0 : i32
    %170 = tpu.memref_slice %arg6[%c14_i32_137, %c0_i32_138] : memref<16x128xf32, #tpu.memory_space<vmem>> -> memref<1x128xf32, #tpu.memory_space<vmem>>
    %171 = tpu.memref_slice %arg7[%c14_i32_134] : memref<16x!tpu.dma_semaphore, #tpu.memory_space<semaphore_mem>> -> memref<1x!tpu.dma_semaphore, #tpu.memory_space<semaphore_mem>>
    %172 = tpu.memref_squeeze %171 : memref<1x!tpu.dma_semaphore, #tpu.memory_space<semaphore_mem>> -> memref<!tpu.dma_semaphore, #tpu.memory_space<semaphore_mem>>
    tpu.wait_dma2 semaphore(%172 : memref<!tpu.dma_semaphore, #tpu.memory_space<semaphore_mem>>) src(%169 : memref<1x128xf32, #tpu.memory_space<any>>) dst(%170 : memref<1x128xf32, #tpu.memory_space<vmem>>)
    %c15_i32_139 = arith.constant 15 : i32
    %c0_i32_140 = arith.constant 0 : i32
    %c0_i32_141 = arith.constant 0 : i32
    %173 = tpu.memref_slice %arg4[%c0_i32_140, %c0_i32_141] : memref<64x128xf32, #tpu.memory_space<any>> -> memref<1x128xf32, #tpu.memory_space<any>>
    %c15_i32_142 = arith.constant 15 : i32
    %c0_i32_143 = arith.constant 0 : i32
    %174 = tpu.memref_slice %arg6[%c15_i32_142, %c0_i32_143] : memref<16x128xf32, #tpu.memory_space<vmem>> -> memref<1x128xf32, #tpu.memory_space<vmem>>
    %175 = tpu.memref_slice %arg7[%c15_i32_139] : memref<16x!tpu.dma_semaphore, #tpu.memory_space<semaphore_mem>> -> memref<1x!tpu.dma_semaphore, #tpu.memory_space<semaphore_mem>>
    %176 = tpu.memref_squeeze %175 : memref<1x!tpu.dma_semaphore, #tpu.memory_space<semaphore_mem>> -> memref<!tpu.dma_semaphore, #tpu.memory_space<semaphore_mem>>
    tpu.wait_dma2 semaphore(%176 : memref<!tpu.dma_semaphore, #tpu.memory_space<semaphore_mem>>) src(%173 : memref<1x128xf32, #tpu.memory_space<any>>) dst(%174 : memref<1x128xf32, #tpu.memory_space<vmem>>)
    %c0 = arith.constant 0 : index
    %c0_144 = arith.constant 0 : index
    %177 = vector.load %arg6[%c0, %c0_144] : memref<16x128xf32, #tpu.memory_space<vmem>>, vector<16x128xf32>
    %178 = arith.truncf %177 : vector<16x128xf32> to vector<16x128xbf16>
    %c0_145 = arith.constant 0 : index
    %c0_146 = arith.constant 0 : index
    %179 = vector.load %arg3[%c0_145, %c0_146] : memref<128x128xbf16, #tpu.memory_space<vmem>>, vector<128x128xbf16>
    %cst = arith.constant dense<0.000000e+00> : vector<16x128xf32>
    %180 = tpu.matmul %178, %179, %cst {dimension_numbers = #tpu.dot_dimension_numbers<[1], [0], [0], [1], [0, 0, 1, 1], [], []>} : vector<16x128xbf16>, vector<128x128xbf16>, vector<16x128xf32> -> vector<16x128xf32>
    %181 = vector.shape_cast %180 : vector<16x128xf32> to vector<2x8x128xf32>
    %c0_147 = arith.constant 0 : index
    %c0_148 = arith.constant 0 : index
    %c0_149 = arith.constant 0 : index
    %182 = vector.load %arg2[%c0_147, %c0_148, %c0_149] : memref<1x2x8xf32, #tpu.memory_space<vmem>>, vector<1x2x8xf32>
    %183 = vector.shape_cast %182 : vector<1x2x8xf32> to vector<2x8xf32>
    %184 = vector.shape_cast %183 : vector<2x8xf32> to vector<2x8x1xf32>
    %cst_150 = arith.constant dense<0.000000e+00> : vector<2x8xf32>
    %185 = vector.multi_reduction <add>, %181, %cst_150 [2] : vector<2x8x128xf32> to vector<2x8xf32>
    %186 = vector.shape_cast %185 : vector<2x8xf32> to vector<2x8x1xf32>
    %187 = vector.shape_cast %186 : vector<2x8x1xf32> to vector<1x2x8x1xf32>
    %cst_151 = arith.constant dense<0.000000e+00> : vector<1xf32>
    %188 = vector.multi_reduction <add>, %187, %cst_151 [1, 2, 3] : vector<1x2x8x1xf32> to vector<1xf32>
    %189 = vector.shape_cast %188 : vector<1xf32> to vector<1x1x1x1xf32>
    %190 = vector.extract %189[0, 0, 0, 0] : f32 from vector<1x1x1x1xf32>
    %191 = arith.mulf %186, %184 : vector<2x8x1xf32>
    %192 = vector.shape_cast %191 : vector<2x8x1xf32> to vector<1x2x8x1xf32>
    %cst_152 = arith.constant dense<0.000000e+00> : vector<1xf32>
    %193 = vector.multi_reduction <add>, %192, %cst_152 [1, 2, 3] : vector<1x2x8x1xf32> to vector<1xf32>
    %194 = vector.shape_cast %193 : vector<1xf32> to vector<1x1x1x1xf32>
    %195 = vector.extract %194[0, 0, 0, 0] : f32 from vector<1x1x1x1xf32>
    %196 = arith.divf %190, %195 : f32
    %197 = vector.broadcast %196 : f32 to vector<2x8x1xf32>
    %198 = arith.mulf %184, %197 : vector<2x8x1xf32>
    %199 = vector.broadcast %198 : vector<2x8x1xf32> to vector<2x8x128xf32>
    %200 = arith.mulf %181, %199 : vector<2x8x128xf32>
    %c0_153 = arith.constant 0 : index
    %c0_154 = arith.constant 0 : index
    %c0_155 = arith.constant 0 : index
    %201 = vector.load %arg5[%c0_153, %c0_154, %c0_155] : memref<2x8x128xf32, #tpu.memory_space<vmem>>, vector<2x8x128xf32>
    tpu.vector_store %arg5[%c0_153, %c0_154, %c0_155], %200 {strides = array<i32>} : memref<2x8x128xf32, #tpu.memory_space<vmem>>, vector<2x8x128xf32>,
    return
  }
  func.func @transform_0(%arg0: i32, %arg1: memref<32xi32, #tpu.memory_space<smem>>) -> (i32, i32, i32) {
    %c0_i32 = arith.constant 0 : i32
    %c0_i32_0 = arith.constant 0 : i32
    %c0_i32_1 = arith.constant 0 : i32
    return %arg0, %c0_i32, %c0_i32_0 : i32, i32, i32
  }
  func.func @transform_1(%arg0: i32, %arg1: memref<32xi32, #tpu.memory_space<smem>>) -> (i32, i32) {
    %c0_i32 = arith.constant 0 : i32
    %c0_i32_0 = arith.constant 0 : i32
    %c0_i32_1 = arith.constant 0 : i32
    return %c0_i32, %c0_i32_0 : i32, i32
  }
  func.func @transform_3(%arg0: i32, %arg1: memref<32xi32, #tpu.memory_space<smem>>) -> (i32, i32, i32) {
    %c0_i32 = arith.constant 0 : i32
    %c0_i32_0 = arith.constant 0 : i32
    %c0_i32_1 = arith.constant 0 : i32
    return %c0_i32, %arg0, %c0_i32_0 : i32, i32, i32
  }
}

</mosaic_0001>

<llo_original>
// kernel: tpu_custom_call.1
$region0: #{tpu_custom_call.1}
  #allocation0 [shape = 'u32[]', space=smem, size = 0x4, offset = 0x4, fixed_abs, tag = 'smem constant byte address 0x4 - core index']
  #allocation1 [shape = 'u32[144,128]{1,0:T(1,128)}', space=vmem, size = 0x12000, scoped, tag = 'internal scratch']
  #allocation2 [shape = 'f32[16,128]{1,0:T(8,128)}', space=vmem, size = 0x2000, scoped, tag = 'scratch operand']
  #allocation3 [shape = 's32[16]{0}', space=sflag, size = 0x40, scoped, tag = 'scratch operand']
  #allocation4 [shape = 's32[1]{0}', space=sflag, size = 0x4, scoped, tag = 'scoped memory for tpu_custom_call.1']
  #allocation5 [shape = 'u8[512]{0}', space=smem, size = 0x200, scoped, tag = 'prefetched SMEM operand 0']
  #allocation12 [shape = 's32[]', space=sflag, size = 0x4, offset = 0, fixed_abs, tag = 'sflag constant byte address 0x0 - dummy sync flag']
  #allocation13 [shape = 's32[]', space=sflag, size = 0x4, offset = 0, fixed_abs, tag = 'sflag constant byte address 0x0 - dummy sync flag']
  #allocation14 [shape = 'u32[]', space=smem, size = 0x4, offset = 0x44, fixed_abs, tag = 'smem constant byte address 0x44 - assertion arg 0']
  #allocation15 [shape = 'u32[]', space=smem, size = 0x4, offset = 0x48, fixed_abs, tag = 'smem constant byte address 0x48 - assertion arg 1']
  #allocation16 [shape = 's32[]', space=sflag, size = 0x4, offset = 0, fixed_abs, tag = 'sflag constant byte address 0x0 - dummy sync flag']
  #allocation17 [shape = 's32[]', space=sflag, size = 0x4, offset = 0, fixed_abs, tag = 'sflag constant byte address 0x0 - dummy sync flag']
  #allocation18 [shape = 's32[]', space=sflag, size = 0x4, offset = 0, fixed_abs, tag = 'sflag constant byte address 0x0 - dummy sync flag']
  #allocation19 [shape = 's32[]', space=sflag, size = 0x4, offset = 0, fixed_abs, tag = 'sflag constant byte address 0x0 - dummy sync flag']
  #allocation20 [shape = 's32[]', space=sflag, size = 0x4, offset = 0, fixed_abs, tag = 'sflag constant byte address 0x0 - dummy sync flag']
  #allocation21 [shape = 's32[]', space=sflag, size = 0x4, offset = 0, fixed_abs, tag = 'sflag constant byte address 0x0 - dummy sync flag']
  #allocation22 [shape = 's32[]', space=sflag, size = 0x4, offset = 0, fixed_abs, tag = 'sflag constant byte address 0x0 - dummy sync flag']
  #allocation23 [shape = 's32[]', space=sflag, size = 0x4, offset = 0, fixed_abs, tag = 'sflag constant byte address 0x0 - dummy sync flag']
  #allocation24 [shape = 's32[]', space=sflag, size = 0x4, offset = 0, fixed_abs, tag = 'sflag constant byte address 0x0 - dummy sync flag']
  #allocation25 [shape = 's32[]', space=sflag, size = 0x4, offset = 0, fixed_abs, tag = 'sflag constant byte address 0x0 - dummy sync flag']
  #allocation26 [shape = 's32[]', space=sflag, size = 0x4, offset = 0, fixed_abs, tag = 'sflag constant byte address 0x0 - dummy sync flag']
  #allocation27 [shape = 's32[]', space=sflag, size = 0x4, offset = 0, fixed_abs, tag = 'sflag constant byte address 0x0 - dummy sync flag']
  #allocation28 [shape = 's32[]', space=sflag, size = 0x4, offset = 0, fixed_abs, tag = 'sflag constant byte address 0x0 - dummy sync flag']
  #allocation29 [shape = 's32[]', space=sflag, size = 0x4, offset = 0, fixed_abs, tag = 'sflag constant byte address 0x0 - dummy sync flag']
  #allocation30 [shape = 's32[]', space=sflag, size = 0x4, offset = 0, fixed_abs, tag = 'sflag constant byte address 0x0 - dummy sync flag']
  #allocation31 [shape = 's32[]', space=sflag, size = 0x4, offset = 0, fixed_abs, tag = 'sflag constant byte address 0x0 - dummy sync flag']
  #allocation32 [shape = 's32[]', space=sflag, size = 0x4, offset = 0, fixed_abs, tag = 'sflag constant byte address 0x0 - dummy sync flag']
  #allocation33 [shape = 's32[]', space=sflag, size = 0x4, offset = 0, fixed_abs, tag = 'sflag constant byte address 0x0 - dummy sync flag']
  #allocation34 [shape = 's32[]', space=sflag, size = 0x4, offset = 0, fixed_abs, tag = 'sflag constant byte address 0x0 - dummy sync flag']
  #allocation35 [shape = 's32[]', space=sflag, size = 0x4, offset = 0, fixed_abs, tag = 'sflag constant byte address 0x0 - dummy sync flag']
  #allocation36 [shape = 's32[]', space=sflag, size = 0x4, offset = 0, fixed_abs, tag = 'sflag constant byte address 0x0 - dummy sync flag']
  #allocation37 [shape = 's32[]', space=sflag, size = 0x4, offset = 0, fixed_abs, tag = 'sflag constant byte address 0x0 - dummy sync flag']
  #allocation38 [shape = 's32[]', space=sflag, size = 0x4, offset = 0, fixed_abs, tag = 'sflag constant byte address 0x0 - dummy sync flag']
  #allocation39 [shape = 's32[]', space=sflag, size = 0x4, offset = 0, fixed_abs, tag = 'sflag constant byte address 0x0 - dummy sync flag']
  #allocation40 [shape = 's32[]', space=sflag, size = 0x4, offset = 0, fixed_abs, tag = 'sflag constant byte address 0x0 - dummy sync flag']
  #allocation41 [shape = 's32[]', space=sflag, size = 0x4, offset = 0, fixed_abs, tag = 'sflag constant byte address 0x0 - dummy sync flag']
  #allocation42 [shape = 's32[]', space=sflag, size = 0x4, offset = 0, fixed_abs, tag = 'sflag constant byte address 0x0 - dummy sync flag']
  #allocation43 [shape = 's32[]', space=sflag, size = 0x4, offset = 0, fixed_abs, tag = 'sflag constant byte address 0x0 - dummy sync flag']
  #allocation44 [shape = 's32[]', space=sflag, size = 0x4, offset = 0, fixed_abs, tag = 'sflag constant byte address 0x0 - dummy sync flag']
  #allocation45 [shape = 's32[]', space=sflag, size = 0x4, offset = 0, fixed_abs, tag = 'sflag constant byte address 0x0 - dummy sync flag']
  %s0 = inlined_call_operand.hbm [shape: s32[32], index: 0, kind: input, shape index: {}]
  %s1 = inlined_call_operand.hbm [shape: f32[2,2,8], index: 1, kind: input, shape index: {}]
  %s2 = inlined_call_operand.hbm [shape: bf16[128,128], index: 2, kind: input, shape index: {}]
  %s3 = inlined_call_operand.hbm [shape: f32[64,128], index: 3, kind: input, shape index: {}]
  %s4 = inlined_call_operand.hbm [shape: f32[2,16,128], index: 4, kind: output, shape index: {}]
  %s5 = sld [smem:[#allocation0]]
  $region113: #{tpu_custom_call.1} parent=0
    _
  %s7 = ssub.s32 1, %s5
  %s8 = scalar_select 0, %s7, %s5
  %10 = dma.hbm_to_smem %s0, 16, [#allocation5], [#allocation4]
  %11 = dma.done [#allocation4], 16
  %12 = sfence
  $region1: #{tpu_custom_call.1} parent=0
    #allocation6 [shape = 'u8[2048]{0}', space=vmem, size = 0x800, scoped, tag = 'input window, operand 1']
    #allocation7 [shape = 's32[2]{0}', space=sflag, size = 0x8, scoped, tag = 'scoped memory for tpu_custom_call.1']
    #allocation8 [shape = 's32[2]{0}', space=sflag, size = 0x8, scoped, tag = 'scoped memory for tpu_custom_call.1']
    #allocation9 [shape = 'u8[32768]{0}', space=vmem, size = 0x8000, scoped, tag = 'input window, operand 2, single buffered']
    #allocation10 [shape = 's32[1]{0}', space=sflag, size = 0x4, scoped, tag = 'scoped memory for tpu_custom_call.1']
    #allocation11 [shape = 'u8[16384]{0}', space=vmem, size = 0x4000, scoped, tag = 'output window, operand 0']
    %13 = vsyncpa [#allocation7], 0
    %s14 = scalar_lea.sflag [#allocation7], 1
    %15 = vsyncpa %s14, 0
    %16 = vsyncpa [#allocation10], 0
    %17 = vsyncpa [#allocation8], 0
    %s18 = scalar_lea.sflag [#allocation8], 1
    %19 = vsyncpa %s18, 0
    loop: start=0, step=1, limit=4
    $region2: #{tpu_custom_call.1} parent=1 // loop_pre_header
      _
    $region3: #{tpu_custom_call.1} parent=1 // loop_header
      %s21 = sphi 0, %s25
      %p22 = scmp.ge.s32.totalorder %s21, 4
      %s31 = sphi 0, %s33
      %s34 = sphi 0, %s31
      %s35 = sphi 0, %s34
      %s51 = sphi 0, %s35
      %s55 = sphi 0, %s55
      %s57 = sphi 0, %s55
      %s58 = sphi 0, %s57
      %s72 = sphi 0, %s58
      %s78 = sphi 0, %s80
      %s81 = sphi 0, %s78
      %s82 = sphi 0, %s81
      %s98 = sphi 0, %s82
    $region4: #{tpu_custom_call.1} parent=1 // loop_header_branch
      %24 = sbr.rel (%p22) target = $region8
    $region5: #{tpu_custom_call.1} parent=1 // loop_body
      %s26 = ssub.s32 %s21, 1
      %s27 = ssub.s32 %s21, 2
      %s28 = sadd.s32 %s21, 1
      %s29 = ssub.s32 %s21, %s28
      %p30 = scmp.eq.s32.totalorder %s29, 0
      %s32 = sadd.s32 %s31, 1
      %s33 = scalar_select %p30, %s31, %s32
      %p36 = pneg %p30
      %p37 = scmp.eq.s32.totalorder %s21, 1
      %p38 = por %p36, %p37
      %p39 = scmp.ne.s32.totalorder %s31, %s34
      %p40 = scmp.eq.s32.totalorder %s21, 0
      %p41 = por %p39, %p40
      %p42 = scmp.ne.s32.totalorder %s31, %s34
      %p43 = scmp.eq.s32.totalorder %s26, 1
      %p44 = por %p42, %p43
      %p45 = scmp.ne.s32.totalorder %s34, %s35
      %p46 = scmp.eq.s32.totalorder %s26, 0
      %p47 = por %p45, %p46
      %p48 = scmp.ne.s32.totalorder %s34, %s35
      %p49 = scmp.eq.s32.totalorder %s27, 1
      %p50 = por %p48, %p49
      %p52 = scmp.ne.s32.totalorder %s35, %s51
      %p53 = scmp.eq.s32.totalorder %s27, 0
      %p54 = por %p52, %p53
      %s56 = sadd.s32 %s55, 1
      %p59 = scmp.eq.s32.totalorder %s21, 1
      %p60 = scmp.ne.s32.totalorder %s55, %s57
      %p61 = scmp.eq.s32.totalorder %s21, 0
      %p62 = por %p60, %p61
      %p63 = scmp.ne.s32.totalorder %s55, %s57
      %p64 = scmp.eq.s32.totalorder %s26, 1
      %p65 = por %p63, %p64
      %p66 = scmp.ne.s32.totalorder %s57, %s58
      %p67 = scmp.eq.s32.totalorder %s26, 0
      %p68 = por %p66, %p67
      %p69 = scmp.ne.s32.totalorder %s57, %s58
      %p70 = scmp.eq.s32.totalorder %s27, 1
      %p71 = por %p69, %p70
      %p73 = scmp.ne.s32.totalorder %s58, %s72
      %p74 = scmp.eq.s32.totalorder %s27, 0
      %p75 = por %p73, %p74
      %s76 = ssub.s32 %s21, %s28
      %p77 = scmp.eq.s32.totalorder %s76, 0
      %s79 = sadd.s32 %s78, 1
      %s80 = scalar_select %p77, %s78, %s79
      %p83 = pneg %p77
      %p84 = scmp.eq.s32.totalorder %s21, 1
      %p85 = por %p83, %p84
      %p86 = scmp.ne.s32.totalorder %s78, %s81
      %p87 = scmp.eq.s32.totalorder %s21, 0
      %p88 = por %p86, %p87
      %p89 = scmp.ne.s32.totalorder %s78, %s81
      %p90 = scmp.eq.s32.totalorder %s26, 1
      %p91 = por %p89, %p90
      %p92 = scmp.ne.s32.totalorder %s81, %s82
      %p93 = scmp.eq.s32.totalorder %s26, 0
      %p94 = por %p92, %p93
      %p95 = scmp.ne.s32.totalorder %s81, %s82
      %p96 = scmp.eq.s32.totalorder %s27, 1
      %p97 = por %p95, %p96
      %p99 = scmp.ne.s32.totalorder %s82, %s98
      %p100 = scmp.eq.s32.totalorder %s27, 0
      %p101 = por %p99, %p100
      %p102 = scmp.le.s32.totalorder 1, %s21
      %p103 = scmp.lt.s32.totalorder %s21, 3
      %p104 = pnand %p102, %p103
      %p105 = pneg %p104
      // Predicated region
      $region9: #{tpu_custom_call.1} parent=5 // pred_check
        _
      $region10: #{tpu_custom_call.1} parent=5 // pred_check_branch
        %107 = sbr.rel (%p104) target = $region12
      $region11: #{tpu_custom_call.1} parent=5 // pred_region
        %s108 = ssub.s32 %s21, 1
        // Predicated region
        $region13: #{tpu_custom_call.1} parent=11 // pred_check
          %p109 = pneg %p68
        $region14: #{tpu_custom_call.1} parent=11 // pred_check_branch
          %111 = sbr.rel (%p109) target = $region16
        $region15: #{tpu_custom_call.1} parent=11 // pred_region
          %s113 = ssub.s32 1024, 1024
          %114 = vsyncadd [#allocation10], %s113
          %s115 = sshll.u32 [#allocation9], 4
          %s116 = int_to_ptr.vmem [resolvable:$true] %s115
          %121 = dma.hbm_to_vmem [thread:$0]  %s2, 1024, %s116, [#allocation10], 64, 64, 4
        $region16: #{tpu_custom_call.1} parent=11 // pred_fallthru
          _
      $region12: #{tpu_custom_call.1} parent=5 // pred_fallthru
        _
      %p122 = scmp.lt.s32.totalorder %s21, 2
      // Predicated region
      $region17: #{tpu_custom_call.1} parent=5 // pred_check
        %p123 = pneg %p122
      $region18: #{tpu_custom_call.1} parent=5 // pred_check_branch
        %125 = sbr.rel (%p123) target = $region20
      $region19: #{tpu_custom_call.1} parent=5 // pred_region
        // Predicated region
        $region21: #{tpu_custom_call.1} parent=19 // pred_check
          %p126 = pneg %p41
        $region22: #{tpu_custom_call.1} parent=19 // pred_check_branch
          %128 = sbr.rel (%p126) target = $region24
        $region23: #{tpu_custom_call.1} parent=19 // pred_region
          %s129 = sand.u32 %s31, 1
          %s130 = scalar_lea.sflag [#allocation7], %s129
          %s131 = sand.u32 %s31, 1
          %s132 = smul.addr %s131, 2
          %s133 = scalar_lea.vmem [#allocation6], %s132
          %s135 = ssub.s32 32, 32
          %136 = vsyncadd %s130, %s135
          %s137 = smul.addr %s21, 32
          %s138 = scalar_lea.hbm %s1, %s137
          %s140 = sshll.u32 %s133, 4
          %s141 = int_to_ptr.vmem [resolvable:$true] %s140
          %143 = dma.hbm_to_vmem [thread:$0]  %s138, 32, %s141, %s130
        $region24: #{tpu_custom_call.1} parent=19 // pred_fallthru
          _
      $region20: #{tpu_custom_call.1} parent=5 // pred_fallthru
        _
      %p144 = scmp.le.s32.totalorder 1, %s21
      %p145 = scmp.lt.s32.totalorder %s21, 3
      %p146 = pnand %p144, %p145
      %p147 = pneg %p146
      // Predicated region
      $region25: #{tpu_custom_call.1} parent=5 // pred_check
        _
      $region26: #{tpu_custom_call.1} parent=5 // pred_check_branch
        %149 = sbr.rel (%p146) target = $region28
      $region27: #{tpu_custom_call.1} parent=5 // pred_region
        %s150 = ssub.s32 %s21, 1
        %s151 = sand.u32 %s34, 1
        %s152 = scalar_lea.sflag [#allocation7], %s151
        %s153 = sand.u32 %s34, 1
        %s154 = smul.addr %s153, 2
        %s155 = scalar_lea.vmem [#allocation6], %s154
        // Predicated region
        $region29: #{tpu_custom_call.1} parent=27 // pred_check
          %p156 = pneg %p47
        $region30: #{tpu_custom_call.1} parent=27 // pred_check_branch
          %158 = sbr.rel (%p156) target = $region32
        $region31: #{tpu_custom_call.1} parent=27 // pred_region
          %159 = dma.done %s152, 32
        $region32: #{tpu_custom_call.1} parent=27 // pred_fallthru
          _
        // Predicated region
        $region33: #{tpu_custom_call.1} parent=27 // pred_check
          %p160 = pneg %p68
        $region34: #{tpu_custom_call.1} parent=27 // pred_check_branch
          %162 = sbr.rel (%p160) target = $region36
        $region35: #{tpu_custom_call.1} parent=27 // pred_region
          %163 = dma.done [#allocation10], 1024
        $region36: #{tpu_custom_call.1} parent=27 // pred_fallthru
          _
        %s164 = sand.u32 %s34, 1
        %s165 = scalar_lea.sflag [#allocation7], %s164
        %s166 = sand.u32 %s34, 1
        %s167 = smul.addr %s166, 2
        %s168 = scalar_lea.vmem [#allocation6], %s167
        %p169 = pneg %p47
        %p170 = pneg %p44
        %p171 = pneg %p68
        %p172 = pneg %p65
        %p173 = pneg %p94
        %p174 = pneg %p91
        %s175 = sand.u32 %s81, 1
        %s176 = scalar_lea.sflag [#allocation8], %s175
        %s177 = sand.u32 %s81, 1
        %s178 = smul.addr %s177, 16
        %s179 = scalar_lea.vmem [#allocation11], %s178
        %s181 = smul.u32 %s26, 16
        %s182 = sld [smem:[#allocation5 + %s181]]
        %s183 = smul.addr %s182, 16
        %s184 = scalar_lea.hbm %s3, %s183
        // Predicated region
        $region37: #{tpu_custom_call.1} parent=27 // pred_check
          _
        $region38: #{tpu_custom_call.1} parent=27 // pred_check_branch
          %186 = sbr.rel target = $region40
        $region39: #{tpu_custom_call.1} parent=27 // pred_region
          %187 = sst [smem:[#allocation14]] [#allocation13]
          %188 = sst [smem:[#allocation15]] [#allocation12]
        $region40: #{tpu_custom_call.1} parent=27 // pred_fallthru
          _
        %190 = shalt.err (0)
        %s192 = sshll.u32 [#allocation2], 4
        %s193 = int_to_ptr.vmem [resolvable:$true] %s192
        %195 = dma.hbm_to_vmem [thread:$0]  %s184, 16, %s193, [#allocation3]
        %s196 = sadd.s32 %s181, 1
        %s197 = sld [smem:[#allocation5 + %s196]]
        %s198 = smul.addr %s197, 16
        %s199 = scalar_lea.hbm %s3, %s198
        %s200 = scalar_lea.vmem [#allocation2], 1
        %s201 = scalar_lea.sflag [#allocation3], 1
        // Predicated region
        $region41: #{tpu_custom_call.1} parent=27 // pred_check
          _
        $region42: #{tpu_custom_call.1} parent=27 // pred_check_branch
          %203 = sbr.rel target = $region44
        $region43: #{tpu_custom_call.1} parent=27 // pred_region
          %204 = sst [smem:[#allocation14]] [#allocation17]
          %205 = sst [smem:[#allocation15]] [#allocation16]
        $region44: #{tpu_custom_call.1} parent=27 // pred_fallthru
          _
        %207 = shalt.err (0)
        %s209 = sshll.u32 %s200, 4
        %s210 = int_to_ptr.vmem [resolvable:$true] %s209
        %212 = dma.hbm_to_vmem [thread:$0]  %s199, 16, %s210, %s201
        %s213 = sadd.s32 %s181, 2
        %s214 = sld [smem:[#allocation5 + %s213]]
        %s215 = smul.addr %s214, 16
        %s216 = scalar_lea.hbm %s3, %s215
        %s217 = scalar_lea.vmem [#allocation2], 2
        %s218 = scalar_lea.sflag [#allocation3], 2
        // Predicated region
        $region45: #{tpu_custom_call.1} parent=27 // pred_check
          _
        $region46: #{tpu_custom_call.1} parent=27 // pred_check_branch
          %220 = sbr.rel target = $region48
        $region47: #{tpu_custom_call.1} parent=27 // pred_region
          %221 = sst [smem:[#allocation14]] [#allocation19]
          %222 = sst [smem:[#allocation15]] [#allocation18]
        $region48: #{tpu_custom_call.1} parent=27 // pred_fallthru
          _
        %224 = shalt.err (0)
        %s226 = sshll.u32 %s217, 4
        %s227 = int_to_ptr.vmem [resolvable:$true] %s226
        %229 = dma.hbm_to_vmem [thread:$0]  %s216, 16, %s227, %s218
        %s230 = sadd.s32 %s181, 3
        %s231 = sld [smem:[#allocation5 + %s230]]
        %s232 = smul.addr %s231, 16
        %s233 = scalar_lea.hbm %s3, %s232
        %s234 = scalar_lea.vmem [#allocation2], 3
        %s235 = scalar_lea.sflag [#allocation3], 3
        // Predicated region
        $region49: #{tpu_custom_call.1} parent=27 // pred_check
          _
        $region50: #{tpu_custom_call.1} parent=27 // pred_check_branch
          %237 = sbr.rel target = $region52
        $region51: #{tpu_custom_call.1} parent=27 // pred_region
          %238 = sst [smem:[#allocation14]] [#allocation21]
          %239 = sst [smem:[#allocation15]] [#allocation20]
        $region52: #{tpu_custom_call.1} parent=27 // pred_fallthru
          _
        %241 = shalt.err (0)
        %s243 = sshll.u32 %s234, 4
        %s244 = int_to_ptr.vmem [resolvable:$true] %s243
        %246 = dma.hbm_to_vmem [thread:$0]  %s233, 16, %s244, %s235
        %s247 = sadd.s32 %s181, 4
        %s248 = sld [smem:[#allocation5 + %s247]]
        %s249 = smul.addr %s248, 16
        %s250 = scalar_lea.hbm %s3, %s249
        %s251 = scalar_lea.vmem [#allocation2], 4
        %s252 = scalar_lea.sflag [#allocation3], 4
        // Predicated region
        $region53: #{tpu_custom_call.1} parent=27 // pred_check
          _
        $region54: #{tpu_custom_call.1} parent=27 // pred_check_branch
          %254 = sbr.rel target = $region56
        $region55: #{tpu_custom_call.1} parent=27 // pred_region
          %255 = sst [smem:[#allocation14]] [#allocation23]
          %256 = sst [smem:[#allocation15]] [#allocation22]
        $region56: #{tpu_custom_call.1} parent=27 // pred_fallthru
          _
        %258 = shalt.err (0)
        %s260 = sshll.u32 %s251, 4
        %s261 = int_to_ptr.vmem [resolvable:$true] %s260
        %263 = dma.hbm_to_vmem [thread:$0]  %s250, 16, %s261, %s252
        %s264 = sadd.s32 %s181, 5
        %s265 = sld [smem:[#allocation5 + %s264]]
        %s266 = smul.addr %s265, 16
        %s267 = scalar_lea.hbm %s3, %s266
        %s268 = scalar_lea.vmem [#allocation2], 5
        %s269 = scalar_lea.sflag [#allocation3], 5
        // Predicated region
        $region57: #{tpu_custom_call.1} parent=27 // pred_check
          _
        $region58: #{tpu_custom_call.1} parent=27 // pred_check_branch
          %271 = sbr.rel target = $region60
        $region59: #{tpu_custom_call.1} parent=27 // pred_region
          %272 = sst [smem:[#allocation14]] [#allocation25]
          %273 = sst [smem:[#allocation15]] [#allocation24]
        $region60: #{tpu_custom_call.1} parent=27 // pred_fallthru
          _
        %275 = shalt.err (0)
        %s277 = sshll.u32 %s268, 4
        %s278 = int_to_ptr.vmem [resolvable:$true] %s277
        %280 = dma.hbm_to_vmem [thread:$0]  %s267, 16, %s278, %s269
        %s281 = sadd.s32 %s181, 6
        %s282 = sld [smem:[#allocation5 + %s281]]
        %s283 = smul.addr %s282, 16
        %s284 = scalar_lea.hbm %s3, %s283
        %s285 = scalar_lea.vmem [#allocation2], 6
        %s286 = scalar_lea.sflag [#allocation3], 6
        // Predicated region
        $region61: #{tpu_custom_call.1} parent=27 // pred_check
          _
        $region62: #{tpu_custom_call.1} parent=27 // pred_check_branch
          %288 = sbr.rel target = $region64
        $region63: #{tpu_custom_call.1} parent=27 // pred_region
          %289 = sst [smem:[#allocation14]] [#allocation27]
          %290 = sst [smem:[#allocation15]] [#allocation26]
        $region64: #{tpu_custom_call.1} parent=27 // pred_fallthru
          _
        %292 = shalt.err (0)
        %s294 = sshll.u32 %s285, 4
        %s295 = int_to_ptr.vmem [resolvable:$true] %s294
        %297 = dma.hbm_to_vmem [thread:$0]  %s284, 16, %s295, %s286
        %s298 = sadd.s32 %s181, 7
        %s299 = sld [smem:[#allocation5 + %s298]]
        %s300 = smul.addr %s299, 16
        %s301 = scalar_lea.hbm %s3, %s300
        %s302 = scalar_lea.vmem [#allocation2], 7
        %s303 = scalar_lea.sflag [#allocation3], 7
        // Predicated region
        $region65: #{tpu_custom_call.1} parent=27 // pred_check
          _
        $region66: #{tpu_custom_call.1} parent=27 // pred_check_branch
          %305 = sbr.rel target = $region68
        $region67: #{tpu_custom_call.1} parent=27 // pred_region
          %306 = sst [smem:[#allocation14]] [#allocation29]
          %307 = sst [smem:[#allocation15]] [#allocation28]
        $region68: #{tpu_custom_call.1} parent=27 // pred_fallthru
          _
        %309 = shalt.err (0)
        %s311 = sshll.u32 %s302, 4
        %s312 = int_to_ptr.vmem [resolvable:$true] %s311
        %314 = dma.hbm_to_vmem [thread:$0]  %s301, 16, %s312, %s303
        %s315 = sadd.s32 %s181, 8
        %s316 = sld [smem:[#allocation5 + %s315]]
        %s317 = smul.addr %s316, 16
        %s318 = scalar_lea.hbm %s3, %s317
        %s319 = scalar_lea.vmem [#allocation2], 8
        %s320 = scalar_lea.sflag [#allocation3], 8
        // Predicated region
        $region69: #{tpu_custom_call.1} parent=27 // pred_check
          _
        $region70: #{tpu_custom_call.1} parent=27 // pred_check_branch
          %322 = sbr.rel target = $region72
        $region71: #{tpu_custom_call.1} parent=27 // pred_region
          %323 = sst [smem:[#allocation14]] [#allocation31]
          %324 = sst [smem:[#allocation15]] [#allocation30]
        $region72: #{tpu_custom_call.1} parent=27 // pred_fallthru
          _
        %326 = shalt.err (0)
        %s328 = sshll.u32 %s319, 4
        %s329 = int_to_ptr.vmem [resolvable:$true] %s328
        %331 = dma.hbm_to_vmem [thread:$0]  %s318, 16, %s329, %s320
        %s332 = sadd.s32 %s181, 9
        %s333 = sld [smem:[#allocation5 + %s332]]
        %s334 = smul.addr %s333, 16
        %s335 = scalar_lea.hbm %s3, %s334
        %s336 = scalar_lea.vmem [#allocation2], 9
        %s337 = scalar_lea.sflag [#allocation3], 9
        // Predicated region
        $region73: #{tpu_custom_call.1} parent=27 // pred_check
          _
        $region74: #{tpu_custom_call.1} parent=27 // pred_check_branch
          %339 = sbr.rel target = $region76
        $region75: #{tpu_custom_call.1} parent=27 // pred_region
          %340 = sst [smem:[#allocation14]] [#allocation33]
          %341 = sst [smem:[#allocation15]] [#allocation32]
        $region76: #{tpu_custom_call.1} parent=27 // pred_fallthru
          _
        %343 = shalt.err (0)
        %s345 = sshll.u32 %s336, 4
        %s346 = int_to_ptr.vmem [resolvable:$true] %s345
        %348 = dma.hbm_to_vmem [thread:$0]  %s335, 16, %s346, %s337
        %s349 = sadd.s32 %s181, 10
        %s350 = sld [smem:[#allocation5 + %s349]]
        %s351 = smul.addr %s350, 16
        %s352 = scalar_lea.hbm %s3, %s351
        %s353 = scalar_lea.vmem [#allocation2], 10
        %s354 = scalar_lea.sflag [#allocation3], 10
        // Predicated region
        $region77: #{tpu_custom_call.1} parent=27 // pred_check
          _
        $region78: #{tpu_custom_call.1} parent=27 // pred_check_branch
          %356 = sbr.rel target = $region80
        $region79: #{tpu_custom_call.1} parent=27 // pred_region
          %357 = sst [smem:[#allocation14]] [#allocation35]
          %358 = sst [smem:[#allocation15]] [#allocation34]
        $region80: #{tpu_custom_call.1} parent=27 // pred_fallthru
          _
        %360 = shalt.err (0)
        %s362 = sshll.u32 %s353, 4
        %s363 = int_to_ptr.vmem [resolvable:$true] %s362
        %365 = dma.hbm_to_vmem [thread:$0]  %s352, 16, %s363, %s354
        %s366 = sadd.s32 %s181, 11
        %s367 = sld [smem:[#allocation5 + %s366]]
        %s368 = smul.addr %s367, 16
        %s369 = scalar_lea.hbm %s3, %s368
        %s370 = scalar_lea.vmem [#allocation2], 11
        %s371 = scalar_lea.sflag [#allocation3], 11
        // Predicated region
        $region81: #{tpu_custom_call.1} parent=27 // pred_check
          _
        $region82: #{tpu_custom_call.1} parent=27 // pred_check_branch
          %373 = sbr.rel target = $region84
        $region83: #{tpu_custom_call.1} parent=27 // pred_region
          %374 = sst [smem:[#allocation14]] [#allocation37]
          %375 = sst [smem:[#allocation15]] [#allocation36]
        $region84: #{tpu_custom_call.1} parent=27 // pred_fallthru
          _
        %377 = shalt.err (0)
        %s379 = sshll.u32 %s370, 4
        %s380 = int_to_ptr.vmem [resolvable:$true] %s379
        %382 = dma.hbm_to_vmem [thread:$0]  %s369, 16, %s380, %s371
        %s383 = sadd.s32 %s181, 12
        %s384 = sld [smem:[#allocation5 + %s383]]
        %s385 = smul.addr %s384, 16
        %s386 = scalar_lea.hbm %s3, %s385
        %s387 = scalar_lea.vmem [#allocation2], 12
        %s388 = scalar_lea.sflag [#allocation3], 12
        // Predicated region
        $region85: #{tpu_custom_call.1} parent=27 // pred_check
          _
        $region86: #{tpu_custom_call.1} parent=27 // pred_check_branch
          %390 = sbr.rel target = $region88
        $region87: #{tpu_custom_call.1} parent=27 // pred_region
          %391 = sst [smem:[#allocation14]] [#allocation39]
          %392 = sst [smem:[#allocation15]] [#allocation38]
        $region88: #{tpu_custom_call.1} parent=27 // pred_fallthru
          _
        %394 = shalt.err (0)
        %s396 = sshll.u32 %s387, 4
        %s397 = int_to_ptr.vmem [resolvable:$true] %s396
        %399 = dma.hbm_to_vmem [thread:$0]  %s386, 16, %s397, %s388
        %s400 = sadd.s32 %s181, 13
        %s401 = sld [smem:[#allocation5 + %s400]]
        %s402 = smul.addr %s401, 16
        %s403 = scalar_lea.hbm %s3, %s402
        %s404 = scalar_lea.vmem [#allocation2], 13
        %s405 = scalar_lea.sflag [#allocation3], 13
        // Predicated region
        $region89: #{tpu_custom_call.1} parent=27 // pred_check
          _
        $region90: #{tpu_custom_call.1} parent=27 // pred_check_branch
          %407 = sbr.rel target = $region92
        $region91: #{tpu_custom_call.1} parent=27 // pred_region
          %408 = sst [smem:[#allocation14]] [#allocation41]
          %409 = sst [smem:[#allocation15]] [#allocation40]
        $region92: #{tpu_custom_call.1} parent=27 // pred_fallthru
          _
        %411 = shalt.err (0)
        %s413 = sshll.u32 %s404, 4
        %s414 = int_to_ptr.vmem [resolvable:$true] %s413
        %416 = dma.hbm_to_vmem [thread:$0]  %s403, 16, %s414, %s405
        %s417 = sadd.s32 %s181, 14
        %s418 = sld [smem:[#allocation5 + %s417]]
        %s419 = smul.addr %s418, 16
        %s420 = scalar_lea.hbm %s3, %s419
        %s421 = scalar_lea.vmem [#allocation2], 14
        %s422 = scalar_lea.sflag [#allocation3], 14
        // Predicated region
        $region93: #{tpu_custom_call.1} parent=27 // pred_check
          _
        $region94: #{tpu_custom_call.1} parent=27 // pred_check_branch
          %424 = sbr.rel target = $region96
        $region95: #{tpu_custom_call.1} parent=27 // pred_region
          %425 = sst [smem:[#allocation14]] [#allocation43]
          %426 = sst [smem:[#allocation15]] [#allocation42]
        $region96: #{tpu_custom_call.1} parent=27 // pred_fallthru
          _
        %428 = shalt.err (0)
        %s430 = sshll.u32 %s421, 4
        %s431 = int_to_ptr.vmem [resolvable:$true] %s430
        %433 = dma.hbm_to_vmem [thread:$0]  %s420, 16, %s431, %s422
        %s434 = sadd.s32 %s181, 15
        %s435 = sld [smem:[#allocation5 + %s434]]
        %s436 = smul.addr %s435, 16
        %s437 = scalar_lea.hbm %s3, %s436
        %s438 = scalar_lea.vmem [#allocation2], 15
        %s439 = scalar_lea.sflag [#allocation3], 15
        // Predicated region
        $region97: #{tpu_custom_call.1} parent=27 // pred_check
          _
        $region98: #{tpu_custom_call.1} parent=27 // pred_check_branch
          %441 = sbr.rel target = $region100
        $region99: #{tpu_custom_call.1} parent=27 // pred_region
          %442 = sst [smem:[#allocation14]] [#allocation45]
          %443 = sst [smem:[#allocation15]] [#allocation44]
        $region100: #{tpu_custom_call.1} parent=27 // pred_fallthru
          _
        %445 = shalt.err (0)
        %s447 = sshll.u32 %s438, 4
        %s448 = int_to_ptr.vmem [resolvable:$true] %s447
        %450 = dma.hbm_to_vmem [thread:$0]  %s437, 16, %s448, %s439
        %s451 = smul.u32 1, 1
        %s452 = sshll.u32 %s451, 4
        %453 = dma.done [#allocation3], %s452
        %s454 = sshll.u32 %s451, 4
        %455 = dma.done %s201, %s454
        %s456 = sshll.u32 %s451, 4
        %457 = dma.done %s218, %s456
        %s458 = sshll.u32 %s451, 4
        %459 = dma.done %s235, %s458
        %s460 = sshll.u32 %s451, 4
        %461 = dma.done %s252, %s460
        %s462 = sshll.u32 %s451, 4
        %463 = dma.done %s269, %s462
        %s464 = sshll.u32 %s451, 4
        %465 = dma.done %s286, %s464
        %s466 = sshll.u32 %s451, 4
        %467 = dma.done %s303, %s466
        %s468 = sshll.u32 %s451, 4
        %469 = dma.done %s320, %s468
        %s470 = sshll.u32 %s451, 4
        %471 = dma.done %s337, %s470
        %s472 = sshll.u32 %s451, 4
        %473 = dma.done %s354, %s472
        %s474 = sshll.u32 %s451, 4
        %475 = dma.done %s371, %s474
        %s476 = sshll.u32 %s451, 4
        %477 = dma.done %s388, %s476
        %s478 = sshll.u32 %s451, 4
        %479 = dma.done %s405, %s478
        %s480 = sshll.u32 %s451, 4
        %481 = dma.done %s422, %s480
        %s482 = sshll.u32 %s451, 4
        %483 = dma.done %s439, %s482
        %v484 = vld [vmem:[#allocation2] sm:$0xff]
        %v485 = vld [vmem:[#allocation2 + $0x8] sm:$0xff]
        %v486 = vpack.c.bf16 %v485, %v484
        %v487 = vld [vmem:[#allocation9] sm:$0xf]
        %v488 = vld [vmem:[#allocation9 + $0x4] sm:$0xf]
        %v489 = vld [vmem:[#allocation9 + $0x8] sm:$0xf]
        %v490 = vld [vmem:[#allocation9 + $0xc] sm:$0xf]
        %v491 = vld [vmem:[#allocation9 + $0x10] sm:$0xf]
        %v492 = vld [vmem:[#allocation9 + $0x14] sm:$0xf]
        %v493 = vld [vmem:[#allocation9 + $0x18] sm:$0xf]
        %v494 = vld [vmem:[#allocation9 + $0x1c] sm:$0xf]
        %v495 = vld [vmem:[#allocation9 + $0x20] sm:$0xf]
        %v496 = vld [vmem:[#allocation9 + $0x24] sm:$0xf]
        %v497 = vld [vmem:[#allocation9 + $0x28] sm:$0xf]
        %v498 = vld [vmem:[#allocation9 + $0x2c] sm:$0xf]
        %v499 = vld [vmem:[#allocation9 + $0x30] sm:$0xf]
        %v500 = vld [vmem:[#allocation9 + $0x34] sm:$0xf]
        %v501 = vld [vmem:[#allocation9 + $0x38] sm:$0xf]
        %v502 = vld [vmem:[#allocation9 + $0x3c] sm:$0xf]
        %v519 = vunpack.c.l.b16 %v487
        %v520 = vunpack.c.l.b16 %v488
        %v521 = vunpack.c.l.b16 %v489
        %v522 = vunpack.c.l.b16 %v490
        %v523 = vunpack.c.l.b16 %v491
        %v524 = vunpack.c.l.b16 %v492
        %v525 = vunpack.c.l.b16 %v493
        %v526 = vunpack.c.l.b16 %v494
        %v527 = vunpack.c.l.b16 %v495
        %v528 = vunpack.c.l.b16 %v496
        %v529 = vunpack.c.l.b16 %v497
        %v530 = vunpack.c.l.b16 %v498
        %v531 = vunpack.c.l.b16 %v499
        %v532 = vunpack.c.l.b16 %v500
        %v533 = vunpack.c.l.b16 %v501
        %v534 = vunpack.c.l.b16 %v502
        %v535 = vpack.c.b16 %v520, %v519
        %v536 = vpack.c.b16 %v522, %v521
        %v537 = vpack.c.b16 %v524, %v523
        %v538 = vpack.c.b16 %v526, %v525
        %v539 = vpack.c.b16 %v528, %v527
        %v540 = vpack.c.b16 %v530, %v529
        %v541 = vpack.c.b16 %v532, %v531
        %v542 = vpack.c.b16 %v534, %v533
        %551 = vmatprep.subr.bf16.mxu0 0
        %552 = vmatpush1.bf16.msra.mxu0 %v535
        %553 = vmatprep.subr.bf16.mxu0 0
        %554 = vmatpush1.bf16.msra.mxu0 %v536
        %555 = vmatprep.subr.bf16.mxu0 0
        %556 = vmatpush1.bf16.msra.mxu0 %v537
        %557 = vmatprep.subr.bf16.mxu0 0
        %558 = vmatpush1.bf16.msra.mxu0 %v538
        %559 = vmatprep.subr.bf16.mxu0 0
        %560 = vmatpush1.bf16.msra.mxu0 %v539
        %561 = vmatprep.subr.bf16.mxu0 0
        %562 = vmatpush1.bf16.msra.mxu0 %v540
        %563 = vmatprep.subr.bf16.mxu0 0
        %564 = vmatpush1.bf16.msra.mxu0 %v541
        %565 = vmatprep.subr.bf16.mxu0 0
        %566 = vmatpush1.bf16.msra.mxu0 %v542
        %567 = vmatprep.subr.bf16.mxu0 0
        %568 = vmatpush1.bf16.msra.mxu0 0
        %569 = vmatprep.subr.bf16.mxu0 0
        %570 = vmatpush1.bf16.msra.mxu0 0
        %571 = vmatprep.subr.bf16.mxu0 0
        %572 = vmatpush1.bf16.msra.mxu0 0
        %573 = vmatprep.subr.bf16.mxu0 0
        %574 = vmatpush1.bf16.msra.mxu0 0
        %575 = vmatprep.subr.bf16.mxu0 0
        %576 = vmatpush1.bf16.msra.mxu0 0
        %577 = vmatprep.subr.bf16.mxu0 0
        %578 = vmatpush1.bf16.msra.mxu0 0
        %579 = vmatprep.subr.bf16.mxu0 0
        %580 = vmatpush1.bf16.msra.mxu0 0
        %581 = vmatprep.subr.bf16.mxu0 0
        %582 = vmatpush1.bf16.msra.mxu0 0
        %583 = vmatprep.mubr.bf16.mxu0 0
        %584 = vmatmul.mubr.bf16.gmra.mrb[0].mxu0 %v486
        %v585 = vpop.f32.mrb[0].mxu0
        %v586 = vadd.f32 0.0, %v585
        %v587 = vpop.f32.mrb[0].mxu0
        %v588 = vpop.f32.mrb[0].mxu0
        %v589 = vadd.f32 0.0, %v588
        %v590 = vpop.f32.mrb[0].mxu0
        %591 = vdwg.mxu0
        %v592 = vld [vmem:[%s155] sm:$0x3]
        %v593 = vlaneseq
        %v594 = vshrl.u32 %v593, 7
        %v595 = vsub.s32 0, %v594
        %v596 = vrot.slane %v592, %v595
        %598 = vbcast.lane.b32.xlu0 %v596, 256
        %v599 = vpop.permute.xlu0 %598
        %v600 = vlaneseq
        %v601 = vshrl.u32 %v600, 7
        %v602 = vsub.s32 1, %v601
        %v603 = vrot.slane %v592, %v602
        %605 = vbcast.lane.b32.xlu0 %v603, 256
        %v606 = vpop.permute.xlu0 %605
        %607 = vadd.xlane.f32.xlu0 %v586
        %v608 = vpop.xlane.xlu0 %607
        %609 = vadd.xlane.f32.xlu0 %v589
        %v610 = vpop.xlane.xlu0 %609
        %vm611 = vcmask 7168
        %v612 = vsel %vm611, %v608, 0.0
        %v613 = vsel %vm611, %v610, 0.0
        %v614 = vadd.f32 %v612, %v613
        %615 = vadd.xlane.f32.xlu0 %v614
        %v616 = vpop.xlane.xlu0 %615
        %v617 = vrot.slane %v616, 4
        %v618 = vadd.f32 %v616, %v617
        %v619 = vrot.slane %v618, 2
        %v620 = vadd.f32 %v618, %v619
        %v621 = vrot.slane %v620, 1
        %v622 = vadd.f32 %v620, %v621
        %s623 = vtos %v622
        %v624 = vmul.f32 %v608, %v599
        %v625 = vmul.f32 %v610, %v606
        %v626 = vsel %vm611, %v624, 0.0
        %v627 = vsel %vm611, %v625, 0.0
        %v628 = vadd.f32 %v626, %v627
        %629 = vadd.xlane.f32.xlu0 %v628
        %v630 = vpop.xlane.xlu0 %629
        %v631 = vrot.slane %v630, 4
        %v632 = vadd.f32 %v630, %v631
        %v633 = vrot.slane %v632, 2
        %v634 = vadd.f32 %v632, %v633
        %v635 = vrot.slane %v634, 1
        %v636 = vadd.f32 %v634, %v635
        %s637 = vtos %v636
        %v638 = vstv %s637
        %v639 = vrcp.pop %v638
        %s640 = vtos %v639
        %s641 = smul.f32 %s623, %s640
        %v642 = vstv %s641
        %v643 = vmul.f32 %v599, %v642
        %v644 = vmul.f32 %v606, %v642
        %v645 = vmul.f32 %v586, %v643
        %v646 = vmul.f32 %v589, %v644
        %647 = vst [vmem:[%s179] sm:$0xff] %v645
        %648 = vst [vmem:[%s179 + $0x8] sm:$0xff] %v646
        %s649 = sand.u32 %s81, 1
        %s650 = scalar_lea.sflag [#allocation8], %s649
        %s651 = sand.u32 %s81, 1
        %s652 = smul.addr %s651, 16
        %s653 = scalar_lea.vmem [#allocation11], %s652
        // Predicated region
        $region101: #{tpu_custom_call.1} parent=27 // pred_check
          %p654 = pneg %p91
        $region102: #{tpu_custom_call.1} parent=27 // pred_check_branch
          %656 = sbr.rel (%p654) target = $region104
        $region103: #{tpu_custom_call.1} parent=27 // pred_region
          %s658 = ssub.s32 256, 256
          %659 = vsyncadd %s650, %s658
          %s660 = smul.addr %s26, 128
          %s661 = scalar_lea.hbm %s4, %s660
          %s662 = sshll.u32 %s653, 4
          %s663 = int_to_ptr.vmem [resolvable:$true] %s662
          %668 = dma.vmem_to_hbm [thread:$0]  %s663, 256, %s661, %s650, 128, 256, 8
        $region104: #{tpu_custom_call.1} parent=27 // pred_fallthru
          _
      $region28: #{tpu_custom_call.1} parent=5 // pred_fallthru
        _
      %p669 = scmp.le.s32.totalorder 2, %s21
      // Predicated region
      $region105: #{tpu_custom_call.1} parent=5 // pred_check
        %p670 = pneg %p669
      $region106: #{tpu_custom_call.1} parent=5 // pred_check_branch
        %672 = sbr.rel (%p670) target = $region108
      $region107: #{tpu_custom_call.1} parent=5 // pred_region
        %s673 = ssub.s32 %s21, 2
        // Predicated region
        $region109: #{tpu_custom_call.1} parent=107 // pred_check
          %p674 = pneg %p97
        $region110: #{tpu_custom_call.1} parent=107 // pred_check_branch
          %676 = sbr.rel (%p674) target = $region112
        $region111: #{tpu_custom_call.1} parent=107 // pred_region
          %s677 = sand.u32 %s82, 1
          %s678 = scalar_lea.sflag [#allocation8], %s677
          %s679 = sand.u32 %s82, 1
          %s680 = smul.addr %s679, 16
          %s681 = scalar_lea.vmem [#allocation11], %s680
          %682 = dma.done %s678, 256
        $region112: #{tpu_custom_call.1} parent=107 // pred_fallthru
          _
      $region108: #{tpu_custom_call.1} parent=5 // pred_fallthru
        _
    $region6: #{tpu_custom_call.1} parent=1 // loop_footer
      %s25 = sadd.s32 1, %s21
    $region7: #{tpu_custom_call.1} parent=1 // loop_footer_branch
      %20 = sbr.rel target = $region3
    $region8: #{tpu_custom_call.1} parent=1 // loop_exit
      _
    %683 = vsyncpa [#allocation7], 1
    %s684 = scalar_lea.sflag [#allocation7], 1
    %685 = vsyncpa %s684, 1
    %686 = vsyncpa [#allocation10], 1
    %687 = vsyncpa [#allocation8], 1
    %s688 = scalar_lea.sflag [#allocation8], 1
    %689 = vsyncpa %s688, 1
  %690 = vsyncmov [#allocation3]
  %s691 = vpop.sfrf %690
  %p692 = scmp.eq.s32.totalorder %s691, 0
  %p693 = pneg %p692
  %695 = shalt.err (%p693)
  %s696 = scalar_lea.sflag [#allocation3], 1
  %697 = vsyncmov %s696
  %s698 = vpop.sfrf %697
  %p699 = scmp.eq.s32.totalorder %s698, 0
  %p700 = pneg %p699
  %702 = shalt.err (%p700)
  %s703 = scalar_lea.sflag [#allocation3], 2
  %704 = vsyncmov %s703
  %s705 = vpop.sfrf %704
  %p706 = scmp.eq.s32.totalorder %s705, 0
  %p707 = pneg %p706
  %709 = shalt.err (%p707)
  %s710 = scalar_lea.sflag [#allocation3], 3
  %711 = vsyncmov %s710
  %s712 = vpop.sfrf %711
  %p713 = scmp.eq.s32.totalorder %s712, 0
  %p714 = pneg %p713
  %716 = shalt.err (%p714)
  %s717 = scalar_lea.sflag [#allocation3], 4
  %718 = vsyncmov %s717
  %s719 = vpop.sfrf %718
  %p720 = scmp.eq.s32.totalorder %s719, 0
  %p721 = pneg %p720
  %723 = shalt.err (%p721)
  %s724 = scalar_lea.sflag [#allocation3], 5
  %725 = vsyncmov %s724
  %s726 = vpop.sfrf %725
  %p727 = scmp.eq.s32.totalorder %s726, 0
  %p728 = pneg %p727
  %730 = shalt.err (%p728)
  %s731 = scalar_lea.sflag [#allocation3], 6
  %732 = vsyncmov %s731
  %s733 = vpop.sfrf %732
  %p734 = scmp.eq.s32.totalorder %s733, 0
  %p735 = pneg %p734
  %737 = shalt.err (%p735)
  %s738 = scalar_lea.sflag [#allocation3], 7
  %739 = vsyncmov %s738
  %s740 = vpop.sfrf %739
  %p741 = scmp.eq.s32.totalorder %s740, 0
  %p742 = pneg %p741
  %744 = shalt.err (%p742)
  %s745 = scalar_lea.sflag [#allocation3], 8
  %746 = vsyncmov %s745
  %s747 = vpop.sfrf %746
  %p748 = scmp.eq.s32.totalorder %s747, 0
  %p749 = pneg %p748
  %751 = shalt.err (%p749)
  %s752 = scalar_lea.sflag [#allocation3], 9
  %753 = vsyncmov %s752
  %s754 = vpop.sfrf %753
  %p755 = scmp.eq.s32.totalorder %s754, 0
  %p756 = pneg %p755
  %758 = shalt.err (%p756)
  %s759 = scalar_lea.sflag [#allocation3], 10
  %760 = vsyncmov %s759
  %s761 = vpop.sfrf %760
  %p762 = scmp.eq.s32.totalorder %s761, 0
  %p763 = pneg %p762
  %765 = shalt.err (%p763)
  %s766 = scalar_lea.sflag [#allocation3], 11
  %767 = vsyncmov %s766
  %s768 = vpop.sfrf %767
  %p769 = scmp.eq.s32.totalorder %s768, 0
  %p770 = pneg %p769
  %772 = shalt.err (%p770)
  %s773 = scalar_lea.sflag [#allocation3], 12
  %774 = vsyncmov %s773
  %s775 = vpop.sfrf %774
  %p776 = scmp.eq.s32.totalorder %s775, 0
  %p777 = pneg %p776
  %779 = shalt.err (%p777)
  %s780 = scalar_lea.sflag [#allocation3], 13
  %781 = vsyncmov %s780
  %s782 = vpop.sfrf %781
  %p783 = scmp.eq.s32.totalorder %s782, 0
  %p784 = pneg %p783
  %786 = shalt.err (%p784)
  %s787 = scalar_lea.sflag [#allocation3], 14
  %788 = vsyncmov %s787
  %s789 = vpop.sfrf %788
  %p790 = scmp.eq.s32.totalorder %s789, 0
  %p791 = pneg %p790
  %793 = shalt.err (%p791)
  %s794 = scalar_lea.sflag [#allocation3], 15
  %795 = vsyncmov %s794
  %s796 = vpop.sfrf %795
  %p797 = scmp.eq.s32.totalorder %s796, 0
  %p798 = pneg %p797
  %800 = shalt.err (%p798)

</llo_original>
